<compile_context>
chip_gen: v7x
topology: tpu7x:2x2x1
jax: 0.10.0
libtpu: 0.0.40
codegen_flags: <defaults>
</compile_context>

<pallas_src>
import jax
import jax.numpy as jnp
from jax.experimental import pallas as pl
from jax.experimental.pallas import tpu as pltpu

# ----------------------------- config ---------------------------------------
B = 2            # batch
C = 3            # image channels
IMG = 16         # image size
PATCH = 8        # patch size
GRID = IMG // PATCH
N_PATCH = GRID * GRID          # 4
SEQ = N_PATCH + 1              # +1 class token -> 5
HID = 32                       # hidden size
HEADS = 4
HEAD_DIM = HID // HEADS        # 8
MLP = 64                       # intermediate size
LAYERS = 2
PROJ = 16                      # projection ("head") dim
EPS = 1e-5
CPP = C * PATCH * PATCH        # 192


def _ru8(n):
    return (n + 7) // 8 * 8


R_TOK = B * SEQ                 # 10 token rows (batch flattened)
RS_TOK = HEADS * R_TOK          # 40 stacked (head, token) rows

# ---- bf16 weight-slab layout (rows x 128 lanes); all offsets 16-aligned ----
OFF_WPATCH = 0
OFF_WQKV = OFF_WPATCH + CPP                  # 192
OFF_WO = OFF_WQKV + LAYERS * HID             # 256
OFF_W1 = OFF_WO + LAYERS * HID               # 320
OFF_W2 = OFF_W1 + LAYERS * HID               # 384
OFF_WPROJ = OFF_W2 + LAYERS * MLP            # 512
OFF_HMASK = OFF_WPROJ + HID                  # 544
W_ROWS = _ru8(OFF_HMASK + RS_TOK)            # 584

# ---- f32 slab layout (rows x 128 lanes); all section starts 8-aligned ------
OFF_EMB = 0
OFF_LNPP = _ru8(OFF_EMB + R_TOK)             # 16  (pre_g, pre_b, post_g, post_b)
OFF_LYR = _ru8(OFF_LNPP + 4)                 # 24  (8 rows per layer)
OFF_BMASK = OFF_LYR + 8 * LAYERS             # 40
F_ROWS = _ru8(OFF_BMASK + R_TOK)             # 56

# ---- lane-dense combined output slab ----------------------------------------
OUT_LANES = 128
OUT_ROWS = _ru8(R_TOK + B)                   # 16


# ----------------------------- fused Pallas kernel ---------------------------
def _ln(x, g, b):
    """LayerNorm over last dim; independent mean / E[x^2] reductions."""
    mu = jnp.mean(x, axis=-1, keepdims=True)
    ms = jnp.mean(x * x, axis=-1, keepdims=True)
    return (x - mu) * jax.lax.rsqrt(ms - mu * mu + EPS) * g + b


def _clip_fused_kernel(tok_ref, w_ref, f_ref, out_ref):
    f32 = jnp.float32
    bf16 = jnp.bfloat16
    R = tok_ref.shape[0]          # B * SEQ
    RS = HEADS * R                # stacked (head, token) rows
    nb = R // SEQ                 # batch

    # precomputed constants, carved from the packed slabs (static slices)
    hmask = w_ref[OFF_HMASK:OFF_HMASK + RS, 0:HID]       # bf16 (RS, HID)
    bmask = f_ref[OFF_BMASK:OFF_BMASK + R, 0:RS]         # f32  (R, RS)

    # ---- embeddings: patch matmul + (cls + positional) bias, pre-LN ---------
    x = jnp.dot(tok_ref[...].astype(bf16),
                w_ref[OFF_WPATCH:OFF_WPATCH + CPP, 0:HID],
                preferred_element_type=f32) + f_ref[OFF_EMB:OFF_EMB + R, 0:HID]
    x = _ln(x, f_ref[OFF_LNPP + 0:OFF_LNPP + 1, 0:HID],
            f_ref[OFF_LNPP + 1:OFF_LNPP + 2, 0:HID])

    # ---- transformer layers (unrolled; activations never leave VMEM) --------
    for l in range(LAYERS):
        lb = OFF_LYR + 8 * l

        # self-attention block
        xn = _ln(x, f_ref[lb + 0:lb + 1, 0:HID], f_ref[lb + 1:lb + 2, 0:HID])
        qkv = jnp.dot(xn.astype(bf16),
                      w_ref[OFF_WQKV + HID * l:OFF_WQKV + HID * (l + 1), 0:3 * HID],
                      preferred_element_type=f32) + f_ref[lb + 4:lb + 5, 0:3 * HID]
        q = qkv[:, 0:HID].astype(bf16)          # 1/sqrt(d) pre-folded into w/b
        k = qkv[:, HID:2 * HID].astype(bf16)
        v = qkv[:, 2 * HID:3 * HID].astype(bf16)

        # stacked per-head K/V: sublane replication + one precomputed bf16 mask
        k_st = jnp.concatenate([k] * HEADS, axis=0) * hmask      # (RS, HID)
        v_st = jnp.concatenate([v] * HEADS, axis=0) * hmask      # (RS, HID)

        # one score matmul + one softmax for all heads and the whole batch
        s = jax.lax.dot_general(q, k_st, (((1,), (1,)), ((), ())),
                                preferred_element_type=f32) + bmask    # (R, RS)
        p = jnp.exp(s - jnp.max(s, axis=-1, keepdims=True)).astype(bf16)
        denom = jnp.dot(p, hmask, preferred_element_type=f32)          # (R, HID)
        ctx = (jnp.dot(p, v_st, preferred_element_type=f32)
               * pl.reciprocal(denom, approx=False))

        attn = jnp.dot(ctx.astype(bf16),
                       w_ref[OFF_WO + HID * l:OFF_WO + HID * (l + 1), 0:HID],
                       preferred_element_type=f32) + f_ref[lb + 5:lb + 6, 0:HID]
        x = x + attn

        # MLP block (CLIP quick_gelu)
        xn2 = _ln(x, f_ref[lb + 2:lb + 3, 0:HID], f_ref[lb + 3:lb + 4, 0:HID])
        h1 = jnp.dot(xn2.astype(bf16),
                     w_ref[OFF_W1 + HID * l:OFF_W1 + HID * (l + 1), 0:MLP],
                     preferred_element_type=f32) + f_ref[lb + 6:lb + 7, 0:MLP]
        h1 = h1 * jax.nn.sigmoid(1.702 * h1)
        h2 = jnp.dot(h1.astype(bf16),
                     w_ref[OFF_W2 + MLP * l:OFF_W2 + MLP * (l + 1), 0:HID],
                     preferred_element_type=f32) + f_ref[lb + 7:lb + 8, 0:HID]
        x = x + h2

    # ---- pooled output: CLS rows kept in f32, post-LN, head projection ------
    cls_tok = jnp.concatenate([x[b * SEQ:b * SEQ + 1, :] for b in range(nb)], axis=0)
    pooled = _ln(cls_tok, f_ref[OFF_LNPP + 2:OFF_LNPP + 3, 0:HID],
                 f_ref[OFF_LNPP + 3:OFF_LNPP + 4, 0:HID])
    pooled = jnp.dot(pooled.astype(bf16),
                     w_ref[OFF_WPROJ:OFF_WPROJ + HID, 0:PROJ],
                     preferred_element_type=f32)                        # (nb, PROJ)
    # TODO(synk): manifold_mapper is None in this synthetic config; skipped.

    # ---- single lane-dense output slab (unmasked full-tile store) -----------
    parts = [jnp.concatenate([x, jnp.zeros((R, OUT_LANES - HID), f32)], axis=1),
             jnp.concatenate([pooled, jnp.zeros((nb, OUT_LANES - PROJ), f32)], axis=1)]
    if OUT_ROWS - R - nb > 0:
        parts.append(jnp.zeros((OUT_ROWS - R - nb, OUT_LANES), f32))
    out_ref[...] = jnp.concatenate(parts, axis=0)


# ----------------------------- parameters -----------------------------------
def init_params(key):
    keys = jax.random.split(key, 32)
    it = iter(keys)

    def nrm(shape, scale=0.02):
        return (scale * jax.random.normal(next(it), shape)).astype(jnp.float32)

    params = {
        # Conv2d(C, HID, k=PATCH, s=PATCH, bias=False) expressed as a matmul
        'w_patch': nrm((CPP, HID)),
        'cls': nrm((1, 1, HID)),
        'pos': nrm((1, SEQ, HID)),
        'pre_ln_g': jnp.ones((1, HID), jnp.float32),
        'pre_ln_b': jnp.zeros((1, HID), jnp.float32),
        'post_ln_g': jnp.ones((1, HID), jnp.float32),
        'post_ln_b': jnp.zeros((1, HID), jnp.float32),
        'w_proj': nrm((HID, PROJ)),     # head: visual_projection (bias=False)
        'layers': [],
    }
    for _ in range(LAYERS):
        params['layers'].append({
            'ln1_g': jnp.ones((1, HID), jnp.float32),
            'ln1_b': jnp.zeros((1, HID), jnp.float32),
            'wq': nrm((HID, HID)), 'bq': jnp.zeros((1, HID), jnp.float32),
            'wk': nrm((HID, HID)), 'bk': jnp.zeros((1, HID), jnp.float32),
            'wv': nrm((HID, HID)), 'bv': jnp.zeros((1, HID), jnp.float32),
            'wo': nrm((HID, HID)), 'bo': jnp.zeros((1, HID), jnp.float32),
            'ln2_g': jnp.ones((1, HID), jnp.float32),
            'ln2_b': jnp.zeros((1, HID), jnp.float32),
            'w1': nrm((HID, MLP)), 'b1': jnp.zeros((1, MLP), jnp.float32),
            'w2': nrm((MLP, HID)), 'b2': jnp.zeros((1, HID), jnp.float32),
        })
    return params


def pack_params(params, batch):
    """Pack everything into 2 slabs (one bf16 matmul-weight slab, one f32
    param/constant slab).  The attention scale is folded into wq/bq, the cls
    token into the positional-embedding bias, and all indicator/mask
    constants (hmask == blk@hexp, batch-block mask) are precomputed here."""
    f32 = jnp.float32
    R = batch * SEQ
    RS = HEADS * R
    scale = HEAD_DIM ** -0.5

    # ---------------- bf16 matmul-weight slab (W_ROWS, 128) -----------------
    w = jnp.zeros((W_ROWS, 128), f32)
    w = w.at[OFF_WPATCH:OFF_WPATCH + CPP, 0:HID].set(params['w_patch'])
    for l, lp in enumerate(params['layers']):
        wqkv = jnp.concatenate([lp['wq'] * scale, lp['wk'], lp['wv']], axis=1)
        w = w.at[OFF_WQKV + HID * l:OFF_WQKV + HID * (l + 1), 0:3 * HID].set(wqkv)
        w = w.at[OFF_WO + HID * l:OFF_WO + HID * (l + 1), 0:HID].set(lp['wo'])
        w = w.at[OFF_W1 + HID * l:OFF_W1 + HID * (l + 1), 0:MLP].set(lp['w1'])
        w = w.at[OFF_W2 + MLP * l:OFF_W2 + MLP * (l + 1), 0:HID].set(lp['w2'])
    w = w.at[OFF_WPROJ:OFF_WPROJ + HID, 0:PROJ].set(params['w_proj'])
    # per-head lane mask (also the fused blk@hexp softmax-denominator expander)
    c = jnp.arange(RS)[:, None]
    j = jnp.arange(HID)[None, :]
    hmask = ((j // HEAD_DIM) == (c // R)).astype(f32)
    w = w.at[OFF_HMASK:OFF_HMASK + RS, 0:HID].set(hmask)
    w = w.astype(jnp.bfloat16)

    # ---------------- f32 slab: emb bias, LN params, biases, bmask ----------
    f = jnp.zeros((F_ROWS, 128), f32)
    emb = params['pos'][0].at[0].add(params['cls'][0, 0])           # (SEQ, HID)
    f = f.at[OFF_EMB:OFF_EMB + R, 0:HID].set(jnp.tile(emb, (batch, 1)))
    f = f.at[OFF_LNPP + 0, 0:HID].set(params['pre_ln_g'][0])
    f = f.at[OFF_LNPP + 1, 0:HID].set(params['pre_ln_b'][0])
    f = f.at[OFF_LNPP + 2, 0:HID].set(params['post_ln_g'][0])
    f = f.at[OFF_LNPP + 3, 0:HID].set(params['post_ln_b'][0])
    for l, lp in enumerate(params['layers']):
        base = OFF_LYR + 8 * l
        f = f.at[base + 0, 0:HID].set(lp['ln1_g'][0])
        f = f.at[base + 1, 0:HID].set(lp['ln1_b'][0])
        f = f.at[base + 2, 0:HID].set(lp['ln2_g'][0])
        f = f.at[base + 3, 0:HID].set(lp['ln2_b'][0])
        bqkv = jnp.concatenate([lp['bq'] * scale, lp['bk'], lp['bv']], axis=1)
        f = f.at[base + 4, 0:3 * HID].set(bqkv[0])
        f = f.at[base + 5, 0:HID].set(lp['bo'][0])
        f = f.at[base + 6, 0:MLP].set(lp['b1'][0])
        f = f.at[base + 7, 0:HID].set(lp['b2'][0])
    # additive mask: forbid attention across batch elements (f32, -1e30)
    r = jnp.arange(R)[:, None]
    ctok = jnp.arange(RS)[None, :] % R
    bmask = jnp.where((r // SEQ) == (ctok // SEQ), 0.0, -1e30).astype(f32)
    f = f.at[OFF_BMASK:OFF_BMASK + R, 0:RS].set(bmask)
    return {'w': w, 'f': f}


# ----------------------------- forward (Pallas) ------------------------------
@jax.jit
def clip_encoder_forward(packed, pixel_values):
    """Returns (last_hidden_state [B,SEQ,HID], pooled_output [B,PROJ])."""
    Bx = pixel_values.shape[0]     # packed emb/bmask/hmask assume Bx == B
    # patch extraction (pure layout glue): NCHW -> [B, N_PATCH, C*P*P]
    x = pixel_values.reshape(Bx, C, GRID, PATCH, GRID, PATCH)
    x = x.transpose(0, 2, 4, 1, 3, 5).reshape(Bx, N_PATCH, CPP)
    # zero row per image at the CLS position; cls embedding is added in-kernel
    tok = jnp.pad(x, ((0, 0), (1, 0), (0, 0))).reshape(Bx * SEQ, CPP)

    vmem = pl.BlockSpec(memory_space=pltpu.MemorySpace.VMEM)
    out = pl.pallas_call(
        _clip_fused_kernel,
        out_shape=jax.ShapeDtypeStruct((OUT_ROWS, OUT_LANES), jnp.float32),
        in_specs=[vmem, vmem, vmem],
        out_specs=vmem,
        compiler_params=pltpu.CompilerParams(vmem_limit_bytes=32 * 1024 * 1024),
    )(tok, packed['w'], packed['f'])

    R = Bx * SEQ
    last_hidden = out[:R, :HID].reshape(Bx, SEQ, HID)
    pooled = out[R:R + Bx, :PROJ]
    return last_hidden, pooled


# ----------------------------- pure-JAX reference ----------------------------
def reference_forward(params, pixel_values):
    def ln(v, g, b):
        mu = v.mean(-1, keepdims=True)
        var = ((v - mu) ** 2).mean(-1, keepdims=True)
        return (v - mu) * jax.lax.rsqrt(var + EPS) * g + b

    Bx = pixel_values.shape[0]
    x = pixel_values.reshape(Bx, C, GRID, PATCH, GRID, PATCH)
    x = x.transpose(0, 2, 4, 1, 3, 5).reshape(Bx, N_PATCH, CPP)
    patch_emb = x @ params['w_patch']
    cls = jnp.broadcast_to(params['cls'], (Bx, 1, HID))
    h = jnp.concatenate([cls, patch_emb], axis=1) + params['pos']
    h = ln(h, params['pre_ln_g'], params['pre_ln_b'])
    scale = HEAD_DIM ** -0.5
    for lp in params['layers']:
        xn = ln(h, lp['ln1_g'], lp['ln1_b'])
        q = xn @ lp['wq'] + lp['bq']
        k = xn @ lp['wk'] + lp['bk']
        v = xn @ lp['wv'] + lp['bv']
        q = q.reshape(Bx, SEQ, HEADS, HEAD_DIM).transpose(0, 2, 1, 3)
        k = k.reshape(Bx, SEQ, HEADS, HEAD_DIM).transpose(0, 2, 1, 3)
        v = v.reshape(Bx, SEQ, HEADS, HEAD_DIM).transpose(0, 2, 1, 3)
        s = jnp.einsum('bhqd,bhkd->bhqk', q, k) * scale
        p = jax.nn.softmax(s, axis=-1)
        ctx = jnp.einsum('bhqk,bhkd->bhqd', p, v)
        ctx = ctx.transpose(0, 2, 1, 3).reshape(Bx, SEQ, HID)
        h = h + (ctx @ lp['wo'] + lp['bo'])
        xn2 = ln(h, lp['ln2_g'], lp['ln2_b'])
        m = xn2 @ lp['w1'] + lp['b1']
        m = m * jax.nn.sigmoid(1.702 * m)
        h = h + (m @ lp['w2'] + lp['b2'])
    pooled = ln(h[:, 0, :], params['post_ln_g'], params['post_ln_b'])
    pooled = pooled @ params['w_proj']
    return h, pooled


# ----------------------------- main ------------------------------------------
if __name__ == "__main__":
    key = jax.random.PRNGKey(0)
    pkey, xkey = jax.random.split(key)
    params = init_params(pkey)
    packed = pack_params(params, B)
    pixel_values = jax.random.normal(xkey, (B, C, IMG, IMG), dtype=jnp.float32)

    last_hidden, pooled = clip_encoder_forward(packed, pixel_values)
    jax.block_until_ready((last_hidden, pooled))

    ref_last, ref_pooled = reference_forward(params, pixel_values)

    assert last_hidden.shape == (B, SEQ, HID), last_hidden.shape
    assert pooled.shape == (B, PROJ), pooled.shape
    assert bool(jnp.all(jnp.isfinite(last_hidden))) and bool(jnp.all(jnp.isfinite(pooled)))
    # bf16 MXU operands with f32 accumulation -> slightly looser tolerance
    assert jnp.allclose(last_hidden, ref_last, atol=3e-2, rtol=3e-2), \
        float(jnp.max(jnp.abs(last_hidden - ref_last)))
    assert jnp.allclose(pooled, ref_pooled, atol=3e-2, rtol=3e-2), \
        float(jnp.max(jnp.abs(pooled - ref_pooled)))

    print("KERNEL_OK")
</pallas_src>

<mosaic_0001>
module attributes {stable_mosaic.version = 11 : i64} {
  func.func @_clip_fused_kernel(%arg0: memref<10x192xf32, #tpu.memory_space<vmem>>, %arg1: memref<584x128xbf16, #tpu.memory_space<vmem>>, %arg2: memref<56x128xf32, #tpu.memory_space<vmem>>, %arg3: memref<16x128xf32, #tpu.memory_space<vmem>>) attributes {dimension_semantics = [], scalar_prefetch = 0 : i64, scratch_operands = 0 : i64, tpu.core_type = #tpu.core_type<tc>} {
    %c544 = arith.constant 544 : index
    %c0 = arith.constant 0 : index
    %0 = vector.load %arg1[%c544, %c0] : memref<584x128xbf16, #tpu.memory_space<vmem>>, vector<40x32xbf16>
    %c40 = arith.constant 40 : index
    %c0_0 = arith.constant 0 : index
    %1 = vector.load %arg2[%c40, %c0_0] : memref<56x128xf32, #tpu.memory_space<vmem>>, vector<10x40xf32>
    %c0_1 = arith.constant 0 : index
    %c0_2 = arith.constant 0 : index
    %2 = vector.load %arg0[%c0_1, %c0_2] : memref<10x192xf32, #tpu.memory_space<vmem>>, vector<10x192xf32>
    %3 = arith.truncf %2 : vector<10x192xf32> to vector<10x192xbf16>
    %c0_3 = arith.constant 0 : index
    %c0_4 = arith.constant 0 : index
    %4 = vector.load %arg1[%c0_3, %c0_4] : memref<584x128xbf16, #tpu.memory_space<vmem>>, vector<192x32xbf16>
    %cst = arith.constant dense<0.000000e+00> : vector<10x32xf32>
    %5 = tpu.matmul %3, %4, %cst {dimension_numbers = #tpu.dot_dimension_numbers<[1], [0], [0], [1], [0, 0, 1, 1], [], []>} : vector<10x192xbf16>, vector<192x32xbf16>, vector<10x32xf32> -> vector<10x32xf32>
    %c0_5 = arith.constant 0 : index
    %c0_6 = arith.constant 0 : index
    %6 = vector.load %arg2[%c0_5, %c0_6] : memref<56x128xf32, #tpu.memory_space<vmem>>, vector<10x32xf32>
    %7 = arith.addf %5, %6 : vector<10x32xf32>
    %c16 = arith.constant 16 : index
    %c0_7 = arith.constant 0 : index
    %8 = vector.load %arg2[%c16, %c0_7] : memref<56x128xf32, #tpu.memory_space<vmem>>, vector<1x32xf32>
    %c17 = arith.constant 17 : index
    %c0_8 = arith.constant 0 : index
    %9 = vector.load %arg2[%c17, %c0_8] : memref<56x128xf32, #tpu.memory_space<vmem>>, vector<1x32xf32>
    %cst_9 = arith.constant dense<0.000000e+00> : vector<10xf32>
    %10 = vector.multi_reduction <add>, %7, %cst_9 [1] : vector<10x32xf32> to vector<10xf32>
    %11 = vector.shape_cast %10 : vector<10xf32> to vector<10x1xf32>
    %cst_10 = arith.constant 3.200000e+01 : f32
    %12 = vector.broadcast %cst_10 : f32 to vector<10x1xf32>
    %13 = arith.divf %11, %12 : vector<10x1xf32>
    %14 = arith.mulf %7, %7 : vector<10x32xf32>
    %cst_11 = arith.constant dense<0.000000e+00> : vector<10xf32>
    %15 = vector.multi_reduction <add>, %14, %cst_11 [1] : vector<10x32xf32> to vector<10xf32>
    %16 = vector.shape_cast %15 : vector<10xf32> to vector<10x1xf32>
    %cst_12 = arith.constant 3.200000e+01 : f32
    %17 = vector.broadcast %cst_12 : f32 to vector<10x1xf32>
    %18 = arith.divf %16, %17 : vector<10x1xf32>
    %19 = vector.broadcast %13 : vector<10x1xf32> to vector<10x32xf32>
    %20 = arith.subf %7, %19 : vector<10x32xf32>
    %21 = arith.mulf %13, %13 : vector<10x1xf32>
    %22 = arith.subf %18, %21 : vector<10x1xf32>
    %cst_13 = arith.constant 9.99999974E-6 : f32
    %23 = vector.broadcast %cst_13 : f32 to vector<10x1xf32>
    %24 = arith.addf %22, %23 : vector<10x1xf32>
    %25 = math.rsqrt %24 : vector<10x1xf32>
    %26 = vector.broadcast %25 : vector<10x1xf32> to vector<10x32xf32>
    %27 = arith.mulf %20, %26 : vector<10x32xf32>
    %28 = vector.broadcast %8 : vector<1x32xf32> to vector<10x32xf32>
    %29 = arith.mulf %27, %28 : vector<10x32xf32>
    %30 = vector.broadcast %9 : vector<1x32xf32> to vector<10x32xf32>
    %31 = arith.addf %29, %30 : vector<10x32xf32>
    %c24 = arith.constant 24 : index
    %c0_14 = arith.constant 0 : index
    %32 = vector.load %arg2[%c24, %c0_14] : memref<56x128xf32, #tpu.memory_space<vmem>>, vector<1x32xf32>
    %c25 = arith.constant 25 : index
    %c0_15 = arith.constant 0 : index
    %33 = vector.load %arg2[%c25, %c0_15] : memref<56x128xf32, #tpu.memory_space<vmem>>, vector<1x32xf32>
    %cst_16 = arith.constant dense<0.000000e+00> : vector<10xf32>
    %34 = vector.multi_reduction <add>, %31, %cst_16 [1] : vector<10x32xf32> to vector<10xf32>
    %35 = vector.shape_cast %34 : vector<10xf32> to vector<10x1xf32>
    %cst_17 = arith.constant 3.200000e+01 : f32
    %36 = vector.broadcast %cst_17 : f32 to vector<10x1xf32>
    %37 = arith.divf %35, %36 : vector<10x1xf32>
    %38 = arith.mulf %31, %31 : vector<10x32xf32>
    %cst_18 = arith.constant dense<0.000000e+00> : vector<10xf32>
    %39 = vector.multi_reduction <add>, %38, %cst_18 [1] : vector<10x32xf32> to vector<10xf32>
    %40 = vector.shape_cast %39 : vector<10xf32> to vector<10x1xf32>
    %cst_19 = arith.constant 3.200000e+01 : f32
    %41 = vector.broadcast %cst_19 : f32 to vector<10x1xf32>
    %42 = arith.divf %40, %41 : vector<10x1xf32>
    %43 = vector.broadcast %37 : vector<10x1xf32> to vector<10x32xf32>
    %44 = arith.subf %31, %43 : vector<10x32xf32>
    %45 = arith.mulf %37, %37 : vector<10x1xf32>
    %46 = arith.subf %42, %45 : vector<10x1xf32>
    %cst_20 = arith.constant 9.99999974E-6 : f32
    %47 = vector.broadcast %cst_20 : f32 to vector<10x1xf32>
    %48 = arith.addf %46, %47 : vector<10x1xf32>
    %49 = math.rsqrt %48 : vector<10x1xf32>
    %50 = vector.broadcast %49 : vector<10x1xf32> to vector<10x32xf32>
    %51 = arith.mulf %44, %50 : vector<10x32xf32>
    %52 = vector.broadcast %32 : vector<1x32xf32> to vector<10x32xf32>
    %53 = arith.mulf %51, %52 : vector<10x32xf32>
    %54 = vector.broadcast %33 : vector<1x32xf32> to vector<10x32xf32>
    %55 = arith.addf %53, %54 : vector<10x32xf32>
    %56 = arith.truncf %55 : vector<10x32xf32> to vector<10x32xbf16>
    %c192 = arith.constant 192 : index
    %c0_21 = arith.constant 0 : index
    %57 = vector.load %arg1[%c192, %c0_21] : memref<584x128xbf16, #tpu.memory_space<vmem>>, vector<32x96xbf16>
    %cst_22 = arith.constant dense<0.000000e+00> : vector<10x96xf32>
    %58 = tpu.matmul %56, %57, %cst_22 {dimension_numbers = #tpu.dot_dimension_numbers<[1], [0], [0], [1], [0, 0, 1, 1], [], []>} : vector<10x32xbf16>, vector<32x96xbf16>, vector<10x96xf32> -> vector<10x96xf32>
    %c28 = arith.constant 28 : index
    %c0_23 = arith.constant 0 : index
    %59 = vector.load %arg2[%c28, %c0_23] : memref<56x128xf32, #tpu.memory_space<vmem>>, vector<1x96xf32>
    %60 = vector.broadcast %59 : vector<1x96xf32> to vector<10x96xf32>
    %61 = arith.addf %58, %60 : vector<10x96xf32>
    %62 = vector.extract_strided_slice %61 {offsets = [0, 0], sizes = [10, 32], strides = [1, 1]} : vector<10x96xf32> to vector<10x32xf32>
    %63 = arith.truncf %62 : vector<10x32xf32> to vector<10x32xbf16>
    %64 = vector.extract_strided_slice %61 {offsets = [0, 32], sizes = [10, 32], strides = [1, 1]} : vector<10x96xf32> to vector<10x32xf32>
    %65 = arith.truncf %64 : vector<10x32xf32> to vector<10x32xbf16>
    %66 = vector.extract_strided_slice %61 {offsets = [0, 64], sizes = [10, 32], strides = [1, 1]} : vector<10x96xf32> to vector<10x32xf32>
    %67 = arith.truncf %66 : vector<10x32xf32> to vector<10x32xbf16>
    %68 = tpu.concatenate %65, %65, %65, %65 in 0 : vector<10x32xbf16>, vector<10x32xbf16>, vector<10x32xbf16>, vector<10x32xbf16> -> vector<40x32xbf16>
    %69 = arith.mulf %68, %0 : vector<40x32xbf16>
    %70 = tpu.concatenate %67, %67, %67, %67 in 0 : vector<10x32xbf16>, vector<10x32xbf16>, vector<10x32xbf16>, vector<10x32xbf16> -> vector<40x32xbf16>
    %71 = arith.mulf %70, %0 : vector<40x32xbf16>
    %cst_24 = arith.constant dense<0.000000e+00> : vector<10x40xf32>
    %72 = tpu.matmul %63, %69, %cst_24 {dimension_numbers = #tpu.dot_dimension_numbers<[1], [1], [0], [0], [0, 0, 1, 0], [], []>} : vector<10x32xbf16>, vector<40x32xbf16>, vector<10x40xf32> -> vector<10x40xf32>
    %73 = arith.addf %72, %1 : vector<10x40xf32>
    %cst_25 = arith.constant dense<0xFF800000> : vector<10xf32>
    %74 = vector.multi_reduction <maximumf>, %73, %cst_25 [1] : vector<10x40xf32> to vector<10xf32>
    %75 = vector.shape_cast %74 : vector<10xf32> to vector<10x1xf32>
    %76 = vector.broadcast %75 : vector<10x1xf32> to vector<10x40xf32>
    %77 = arith.subf %73, %76 : vector<10x40xf32>
    %78 = math.exp %77 : vector<10x40xf32>
    %79 = arith.truncf %78 : vector<10x40xf32> to vector<10x40xbf16>
    %cst_26 = arith.constant dense<0.000000e+00> : vector<10x32xf32>
    %80 = tpu.matmul %79, %0, %cst_26 {dimension_numbers = #tpu.dot_dimension_numbers<[1], [0], [0], [1], [0, 0, 1, 1], [], []>} : vector<10x40xbf16>, vector<40x32xbf16>, vector<10x32xf32> -> vector<10x32xf32>
    %cst_27 = arith.constant dense<0.000000e+00> : vector<10x32xf32>
    %81 = tpu.matmul %79, %71, %cst_27 {dimension_numbers = #tpu.dot_dimension_numbers<[1], [0], [0], [1], [0, 0, 1, 1], [], []>} : vector<10x40xbf16>, vector<40x32xbf16>, vector<10x32xf32> -> vector<10x32xf32>
    %82 = tpu.reciprocal %80 : vector<10x32xf32> -> vector<10x32xf32>
    %83 = arith.mulf %81, %82 : vector<10x32xf32>
    %84 = arith.truncf %83 : vector<10x32xf32> to vector<10x32xbf16>
    %c256 = arith.constant 256 : index
    %c0_28 = arith.constant 0 : index
    %85 = vector.load %arg1[%c256, %c0_28] : memref<584x128xbf16, #tpu.memory_space<vmem>>, vector<32x32xbf16>
    %cst_29 = arith.constant dense<0.000000e+00> : vector<10x32xf32>
    %86 = tpu.matmul %84, %85, %cst_29 {dimension_numbers = #tpu.dot_dimension_numbers<[1], [0], [0], [1], [0, 0, 1, 1], [], []>} : vector<10x32xbf16>, vector<32x32xbf16>, vector<10x32xf32> -> vector<10x32xf32>
    %c29 = arith.constant 29 : index
    %c0_30 = arith.constant 0 : index
    %87 = vector.load %arg2[%c29, %c0_30] : memref<56x128xf32, #tpu.memory_space<vmem>>, vector<1x32xf32>
    %88 = vector.broadcast %87 : vector<1x32xf32> to vector<10x32xf32>
    %89 = arith.addf %86, %88 : vector<10x32xf32>
    %90 = arith.addf %31, %89 : vector<10x32xf32>
    %c26 = arith.constant 26 : index
    %c0_31 = arith.constant 0 : index
    %91 = vector.load %arg2[%c26, %c0_31] : memref<56x128xf32, #tpu.memory_space<vmem>>, vector<1x32xf32>
    %c27 = arith.constant 27 : index
    %c0_32 = arith.constant 0 : index
    %92 = vector.load %arg2[%c27, %c0_32] : memref<56x128xf32, #tpu.memory_space<vmem>>, vector<1x32xf32>
    %cst_33 = arith.constant dense<0.000000e+00> : vector<10xf32>
    %93 = vector.multi_reduction <add>, %90, %cst_33 [1] : vector<10x32xf32> to vector<10xf32>
    %94 = vector.shape_cast %93 : vector<10xf32> to vector<10x1xf32>
    %cst_34 = arith.constant 3.200000e+01 : f32
    %95 = vector.broadcast %cst_34 : f32 to vector<10x1xf32>
    %96 = arith.divf %94, %95 : vector<10x1xf32>
    %97 = arith.mulf %90, %90 : vector<10x32xf32>
    %cst_35 = arith.constant dense<0.000000e+00> : vector<10xf32>
    %98 = vector.multi_reduction <add>, %97, %cst_35 [1] : vector<10x32xf32> to vector<10xf32>
    %99 = vector.shape_cast %98 : vector<10xf32> to vector<10x1xf32>
    %cst_36 = arith.constant 3.200000e+01 : f32
    %100 = vector.broadcast %cst_36 : f32 to vector<10x1xf32>
    %101 = arith.divf %99, %100 : vector<10x1xf32>
    %102 = vector.broadcast %96 : vector<10x1xf32> to vector<10x32xf32>
    %103 = arith.subf %90, %102 : vector<10x32xf32>
    %104 = arith.mulf %96, %96 : vector<10x1xf32>
    %105 = arith.subf %101, %104 : vector<10x1xf32>
    %cst_37 = arith.constant 9.99999974E-6 : f32
    %106 = vector.broadcast %cst_37 : f32 to vector<10x1xf32>
    %107 = arith.addf %105, %106 : vector<10x1xf32>
    %108 = math.rsqrt %107 : vector<10x1xf32>
    %109 = vector.broadcast %108 : vector<10x1xf32> to vector<10x32xf32>
    %110 = arith.mulf %103, %109 : vector<10x32xf32>
    %111 = vector.broadcast %91 : vector<1x32xf32> to vector<10x32xf32>
    %112 = arith.mulf %110, %111 : vector<10x32xf32>
    %113 = vector.broadcast %92 : vector<1x32xf32> to vector<10x32xf32>
    %114 = arith.addf %112, %113 : vector<10x32xf32>
    %115 = arith.truncf %114 : vector<10x32xf32> to vector<10x32xbf16>
    %c320 = arith.constant 320 : index
    %c0_38 = arith.constant 0 : index
    %116 = vector.load %arg1[%c320, %c0_38] : memref<584x128xbf16, #tpu.memory_space<vmem>>, vector<32x64xbf16>
    %cst_39 = arith.constant dense<0.000000e+00> : vector<10x64xf32>
    %117 = tpu.matmul %115, %116, %cst_39 {dimension_numbers = #tpu.dot_dimension_numbers<[1], [0], [0], [1], [0, 0, 1, 1], [], []>} : vector<10x32xbf16>, vector<32x64xbf16>, vector<10x64xf32> -> vector<10x64xf32>
    %c30 = arith.constant 30 : index
    %c0_40 = arith.constant 0 : index
    %118 = vector.load %arg2[%c30, %c0_40] : memref<56x128xf32, #tpu.memory_space<vmem>>, vector<1x64xf32>
    %119 = vector.broadcast %118 : vector<1x64xf32> to vector<10x64xf32>
    %120 = arith.addf %117, %119 : vector<10x64xf32>
    %cst_41 = arith.constant 1.702000e+00 : f32
    %121 = vector.broadcast %cst_41 : f32 to vector<10x64xf32>
    %122 = arith.mulf %121, %120 : vector<10x64xf32>
    %123 = arith.negf %122 : vector<10x64xf32>
    %124 = math.exp %123 : vector<10x64xf32>
    %cst_42 = arith.constant 1.000000e+00 : f32
    %125 = vector.broadcast %cst_42 : f32 to vector<10x64xf32>
    %126 = arith.addf %125, %124 : vector<10x64xf32>
    %127 = arith.divf %125, %126 : vector<10x64xf32>
    %128 = arith.mulf %120, %127 : vector<10x64xf32>
    %129 = arith.truncf %128 : vector<10x64xf32> to vector<10x64xbf16>
    %c384 = arith.constant 384 : index
    %c0_43 = arith.constant 0 : index
    %130 = vector.load %arg1[%c384, %c0_43] : memref<584x128xbf16, #tpu.memory_space<vmem>>, vector<64x32xbf16>
    %cst_44 = arith.constant dense<0.000000e+00> : vector<10x32xf32>
    %131 = tpu.matmul %129, %130, %cst_44 {dimension_numbers = #tpu.dot_dimension_numbers<[1], [0], [0], [1], [0, 0, 1, 1], [], []>} : vector<10x64xbf16>, vector<64x32xbf16>, vector<10x32xf32> -> vector<10x32xf32>
    %c31 = arith.constant 31 : index
    %c0_45 = arith.constant 0 : index
    %132 = vector.load %arg2[%c31, %c0_45] : memref<56x128xf32, #tpu.memory_space<vmem>>, vector<1x32xf32>
    %133 = vector.broadcast %132 : vector<1x32xf32> to vector<10x32xf32>
    %134 = arith.addf %131, %133 : vector<10x32xf32>
    %135 = arith.addf %90, %134 : vector<10x32xf32>
    %c32 = arith.constant 32 : index
    %c0_46 = arith.constant 0 : index
    %136 = vector.load %arg2[%c32, %c0_46] : memref<56x128xf32, #tpu.memory_space<vmem>>, vector<1x32xf32>
    %c33 = arith.constant 33 : index
    %c0_47 = arith.constant 0 : index
    %137 = vector.load %arg2[%c33, %c0_47] : memref<56x128xf32, #tpu.memory_space<vmem>>, vector<1x32xf32>
    %cst_48 = arith.constant dense<0.000000e+00> : vector<10xf32>
    %138 = vector.multi_reduction <add>, %135, %cst_48 [1] : vector<10x32xf32> to vector<10xf32>
    %139 = vector.shape_cast %138 : vector<10xf32> to vector<10x1xf32>
    %cst_49 = arith.constant 3.200000e+01 : f32
    %140 = vector.broadcast %cst_49 : f32 to vector<10x1xf32>
    %141 = arith.divf %139, %140 : vector<10x1xf32>
    %142 = arith.mulf %135, %135 : vector<10x32xf32>
    %cst_50 = arith.constant dense<0.000000e+00> : vector<10xf32>
    %143 = vector.multi_reduction <add>, %142, %cst_50 [1] : vector<10x32xf32> to vector<10xf32>
    %144 = vector.shape_cast %143 : vector<10xf32> to vector<10x1xf32>
    %cst_51 = arith.constant 3.200000e+01 : f32
    %145 = vector.broadcast %cst_51 : f32 to vector<10x1xf32>
    %146 = arith.divf %144, %145 : vector<10x1xf32>
    %147 = vector.broadcast %141 : vector<10x1xf32> to vector<10x32xf32>
    %148 = arith.subf %135, %147 : vector<10x32xf32>
    %149 = arith.mulf %141, %141 : vector<10x1xf32>
    %150 = arith.subf %146, %149 : vector<10x1xf32>
    %cst_52 = arith.constant 9.99999974E-6 : f32
    %151 = vector.broadcast %cst_52 : f32 to vector<10x1xf32>
    %152 = arith.addf %150, %151 : vector<10x1xf32>
    %153 = math.rsqrt %152 : vector<10x1xf32>
    %154 = vector.broadcast %153 : vector<10x1xf32> to vector<10x32xf32>
    %155 = arith.mulf %148, %154 : vector<10x32xf32>
    %156 = vector.broadcast %136 : vector<1x32xf32> to vector<10x32xf32>
    %157 = arith.mulf %155, %156 : vector<10x32xf32>
    %158 = vector.broadcast %137 : vector<1x32xf32> to vector<10x32xf32>
    %159 = arith.addf %157, %158 : vector<10x32xf32>
    %160 = arith.truncf %159 : vector<10x32xf32> to vector<10x32xbf16>
    %c224 = arith.constant 224 : index
    %c0_53 = arith.constant 0 : index
    %161 = vector.load %arg1[%c224, %c0_53] : memref<584x128xbf16, #tpu.memory_space<vmem>>, vector<32x96xbf16>
    %cst_54 = arith.constant dense<0.000000e+00> : vector<10x96xf32>
    %162 = tpu.matmul %160, %161, %cst_54 {dimension_numbers = #tpu.dot_dimension_numbers<[1], [0], [0], [1], [0, 0, 1, 1], [], []>} : vector<10x32xbf16>, vector<32x96xbf16>, vector<10x96xf32> -> vector<10x96xf32>
    %c36 = arith.constant 36 : index
    %c0_55 = arith.constant 0 : index
    %163 = vector.load %arg2[%c36, %c0_55] : memref<56x128xf32, #tpu.memory_space<vmem>>, vector<1x96xf32>
    %164 = vector.broadcast %163 : vector<1x96xf32> to vector<10x96xf32>
    %165 = arith.addf %162, %164 : vector<10x96xf32>
    %166 = vector.extract_strided_slice %165 {offsets = [0, 0], sizes = [10, 32], strides = [1, 1]} : vector<10x96xf32> to vector<10x32xf32>
    %167 = arith.truncf %166 : vector<10x32xf32> to vector<10x32xbf16>
    %168 = vector.extract_strided_slice %165 {offsets = [0, 32], sizes = [10, 32], strides = [1, 1]} : vector<10x96xf32> to vector<10x32xf32>
    %169 = arith.truncf %168 : vector<10x32xf32> to vector<10x32xbf16>
    %170 = vector.extract_strided_slice %165 {offsets = [0, 64], sizes = [10, 32], strides = [1, 1]} : vector<10x96xf32> to vector<10x32xf32>
    %171 = arith.truncf %170 : vector<10x32xf32> to vector<10x32xbf16>
    %172 = tpu.concatenate %169, %169, %169, %169 in 0 : vector<10x32xbf16>, vector<10x32xbf16>, vector<10x32xbf16>, vector<10x32xbf16> -> vector<40x32xbf16>
    %173 = arith.mulf %172, %0 : vector<40x32xbf16>
    %174 = tpu.concatenate %171, %171, %171, %171 in 0 : vector<10x32xbf16>, vector<10x32xbf16>, vector<10x32xbf16>, vector<10x32xbf16> -> vector<40x32xbf16>
    %175 = arith.mulf %174, %0 : vector<40x32xbf16>
    %cst_56 = arith.constant dense<0.000000e+00> : vector<10x40xf32>
    %176 = tpu.matmul %167, %173, %cst_56 {dimension_numbers = #tpu.dot_dimension_numbers<[1], [1], [0], [0], [0, 0, 1, 0], [], []>} : vector<10x32xbf16>, vector<40x32xbf16>, vector<10x40xf32> -> vector<10x40xf32>
    %177 = arith.addf %176, %1 : vector<10x40xf32>
    %cst_57 = arith.constant dense<0xFF800000> : vector<10xf32>
    %178 = vector.multi_reduction <maximumf>, %177, %cst_57 [1] : vector<10x40xf32> to vector<10xf32>
    %179 = vector.shape_cast %178 : vector<10xf32> to vector<10x1xf32>
    %180 = vector.broadcast %179 : vector<10x1xf32> to vector<10x40xf32>
    %181 = arith.subf %177, %180 : vector<10x40xf32>
    %182 = math.exp %181 : vector<10x40xf32>
    %183 = arith.truncf %182 : vector<10x40xf32> to vector<10x40xbf16>
    %cst_58 = arith.constant dense<0.000000e+00> : vector<10x32xf32>
    %184 = tpu.matmul %183, %0, %cst_58 {dimension_numbers = #tpu.dot_dimension_numbers<[1], [0], [0], [1], [0, 0, 1, 1], [], []>} : vector<10x40xbf16>, vector<40x32xbf16>, vector<10x32xf32> -> vector<10x32xf32>
    %cst_59 = arith.constant dense<0.000000e+00> : vector<10x32xf32>
    %185 = tpu.matmul %183, %175, %cst_59 {dimension_numbers = #tpu.dot_dimension_numbers<[1], [0], [0], [1], [0, 0, 1, 1], [], []>} : vector<10x40xbf16>, vector<40x32xbf16>, vector<10x32xf32> -> vector<10x32xf32>
    %186 = tpu.reciprocal %184 : vector<10x32xf32> -> vector<10x32xf32>
    %187 = arith.mulf %185, %186 : vector<10x32xf32>
    %188 = arith.truncf %187 : vector<10x32xf32> to vector<10x32xbf16>
    %c288 = arith.constant 288 : index
    %c0_60 = arith.constant 0 : index
    %189 = vector.load %arg1[%c288, %c0_60] : memref<584x128xbf16, #tpu.memory_space<vmem>>, vector<32x32xbf16>
    %cst_61 = arith.constant dense<0.000000e+00> : vector<10x32xf32>
    %190 = tpu.matmul %188, %189, %cst_61 {dimension_numbers = #tpu.dot_dimension_numbers<[1], [0], [0], [1], [0, 0, 1, 1], [], []>} : vector<10x32xbf16>, vector<32x32xbf16>, vector<10x32xf32> -> vector<10x32xf32>
    %c37 = arith.constant 37 : index
    %c0_62 = arith.constant 0 : index
    %191 = vector.load %arg2[%c37, %c0_62] : memref<56x128xf32, #tpu.memory_space<vmem>>, vector<1x32xf32>
    %192 = vector.broadcast %191 : vector<1x32xf32> to vector<10x32xf32>
    %193 = arith.addf %190, %192 : vector<10x32xf32>
    %194 = arith.addf %135, %193 : vector<10x32xf32>
    %c34 = arith.constant 34 : index
    %c0_63 = arith.constant 0 : index
    %195 = vector.load %arg2[%c34, %c0_63] : memref<56x128xf32, #tpu.memory_space<vmem>>, vector<1x32xf32>
    %c35 = arith.constant 35 : index
    %c0_64 = arith.constant 0 : index
    %196 = vector.load %arg2[%c35, %c0_64] : memref<56x128xf32, #tpu.memory_space<vmem>>, vector<1x32xf32>
    %cst_65 = arith.constant dense<0.000000e+00> : vector<10xf32>
    %197 = vector.multi_reduction <add>, %194, %cst_65 [1] : vector<10x32xf32> to vector<10xf32>
    %198 = vector.shape_cast %197 : vector<10xf32> to vector<10x1xf32>
    %cst_66 = arith.constant 3.200000e+01 : f32
    %199 = vector.broadcast %cst_66 : f32 to vector<10x1xf32>
    %200 = arith.divf %198, %199 : vector<10x1xf32>
    %201 = arith.mulf %194, %194 : vector<10x32xf32>
    %cst_67 = arith.constant dense<0.000000e+00> : vector<10xf32>
    %202 = vector.multi_reduction <add>, %201, %cst_67 [1] : vector<10x32xf32> to vector<10xf32>
    %203 = vector.shape_cast %202 : vector<10xf32> to vector<10x1xf32>
    %cst_68 = arith.constant 3.200000e+01 : f32
    %204 = vector.broadcast %cst_68 : f32 to vector<10x1xf32>
    %205 = arith.divf %203, %204 : vector<10x1xf32>
    %206 = vector.broadcast %200 : vector<10x1xf32> to vector<10x32xf32>
    %207 = arith.subf %194, %206 : vector<10x32xf32>
    %208 = arith.mulf %200, %200 : vector<10x1xf32>
    %209 = arith.subf %205, %208 : vector<10x1xf32>
    %cst_69 = arith.constant 9.99999974E-6 : f32
    %210 = vector.broadcast %cst_69 : f32 to vector<10x1xf32>
    %211 = arith.addf %209, %210 : vector<10x1xf32>
    %212 = math.rsqrt %211 : vector<10x1xf32>
    %213 = vector.broadcast %212 : vector<10x1xf32> to vector<10x32xf32>
    %214 = arith.mulf %207, %213 : vector<10x32xf32>
    %215 = vector.broadcast %195 : vector<1x32xf32> to vector<10x32xf32>
    %216 = arith.mulf %214, %215 : vector<10x32xf32>
    %217 = vector.broadcast %196 : vector<1x32xf32> to vector<10x32xf32>
    %218 = arith.addf %216, %217 : vector<10x32xf32>
    %219 = arith.truncf %218 : vector<10x32xf32> to vector<10x32xbf16>
    %c352 = arith.constant 352 : index
    %c0_70 = arith.constant 0 : index
    %220 = vector.load %arg1[%c352, %c0_70] : memref<584x128xbf16, #tpu.memory_space<vmem>>, vector<32x64xbf16>
    %cst_71 = arith.constant dense<0.000000e+00> : vector<10x64xf32>
    %221 = tpu.matmul %219, %220, %cst_71 {dimension_numbers = #tpu.dot_dimension_numbers<[1], [0], [0], [1], [0, 0, 1, 1], [], []>} : vector<10x32xbf16>, vector<32x64xbf16>, vector<10x64xf32> -> vector<10x64xf32>
    %c38 = arith.constant 38 : index
    %c0_72 = arith.constant 0 : index
    %222 = vector.load %arg2[%c38, %c0_72] : memref<56x128xf32, #tpu.memory_space<vmem>>, vector<1x64xf32>
    %223 = vector.broadcast %222 : vector<1x64xf32> to vector<10x64xf32>
    %224 = arith.addf %221, %223 : vector<10x64xf32>
    %cst_73 = arith.constant 1.702000e+00 : f32
    %225 = vector.broadcast %cst_73 : f32 to vector<10x64xf32>
    %226 = arith.mulf %225, %224 : vector<10x64xf32>
    %227 = arith.negf %226 : vector<10x64xf32>
    %228 = math.exp %227 : vector<10x64xf32>
    %cst_74 = arith.constant 1.000000e+00 : f32
    %229 = vector.broadcast %cst_74 : f32 to vector<10x64xf32>
    %230 = arith.addf %229, %228 : vector<10x64xf32>
    %231 = arith.divf %229, %230 : vector<10x64xf32>
    %232 = arith.mulf %224, %231 : vector<10x64xf32>
    %233 = arith.truncf %232 : vector<10x64xf32> to vector<10x64xbf16>
    %c448 = arith.constant 448 : index
    %c0_75 = arith.constant 0 : index
    %234 = vector.load %arg1[%c448, %c0_75] : memref<584x128xbf16, #tpu.memory_space<vmem>>, vector<64x32xbf16>
    %cst_76 = arith.constant dense<0.000000e+00> : vector<10x32xf32>
    %235 = tpu.matmul %233, %234, %cst_76 {dimension_numbers = #tpu.dot_dimension_numbers<[1], [0], [0], [1], [0, 0, 1, 1], [], []>} : vector<10x64xbf16>, vector<64x32xbf16>, vector<10x32xf32> -> vector<10x32xf32>
    %c39 = arith.constant 39 : index
    %c0_77 = arith.constant 0 : index
    %236 = vector.load %arg2[%c39, %c0_77] : memref<56x128xf32, #tpu.memory_space<vmem>>, vector<1x32xf32>
    %237 = vector.broadcast %236 : vector<1x32xf32> to vector<10x32xf32>
    %238 = arith.addf %235, %237 : vector<10x32xf32>
    %239 = arith.addf %194, %238 : vector<10x32xf32>
    %240 = vector.extract_strided_slice %239 {offsets = [0, 0], sizes = [1, 32], strides = [1, 1]} : vector<10x32xf32> to vector<1x32xf32>
    %241 = vector.extract_strided_slice %239 {offsets = [5, 0], sizes = [1, 32], strides = [1, 1]} : vector<10x32xf32> to vector<1x32xf32>
    %242 = tpu.concatenate %240, %241 in 0 : vector<1x32xf32>, vector<1x32xf32> -> vector<2x32xf32>
    %c18 = arith.constant 18 : index
    %c0_78 = arith.constant 0 : index
    %243 = vector.load %arg2[%c18, %c0_78] : memref<56x128xf32, #tpu.memory_space<vmem>>, vector<1x32xf32>
    %c19 = arith.constant 19 : index
    %c0_79 = arith.constant 0 : index
    %244 = vector.load %arg2[%c19, %c0_79] : memref<56x128xf32, #tpu.memory_space<vmem>>, vector<1x32xf32>
    %cst_80 = arith.constant dense<0.000000e+00> : vector<2xf32>
    %245 = vector.multi_reduction <add>, %242, %cst_80 [1] : vector<2x32xf32> to vector<2xf32>
    %246 = vector.shape_cast %245 : vector<2xf32> to vector<2x1xf32>
    %cst_81 = arith.constant 3.200000e+01 : f32
    %247 = vector.broadcast %cst_81 : f32 to vector<2x1xf32>
    %248 = arith.divf %246, %247 : vector<2x1xf32>
    %249 = arith.mulf %242, %242 : vector<2x32xf32>
    %cst_82 = arith.constant dense<0.000000e+00> : vector<2xf32>
    %250 = vector.multi_reduction <add>, %249, %cst_82 [1] : vector<2x32xf32> to vector<2xf32>
    %251 = vector.shape_cast %250 : vector<2xf32> to vector<2x1xf32>
    %cst_83 = arith.constant 3.200000e+01 : f32
    %252 = vector.broadcast %cst_83 : f32 to vector<2x1xf32>
    %253 = arith.divf %251, %252 : vector<2x1xf32>
    %254 = vector.broadcast %248 : vector<2x1xf32> to vector<2x32xf32>
    %255 = arith.subf %242, %254 : vector<2x32xf32>
    %256 = arith.mulf %248, %248 : vector<2x1xf32>
    %257 = arith.subf %253, %256 : vector<2x1xf32>
    %cst_84 = arith.constant 9.99999974E-6 : f32
    %258 = vector.broadcast %cst_84 : f32 to vector<2x1xf32>
    %259 = arith.addf %257, %258 : vector<2x1xf32>
    %260 = math.rsqrt %259 : vector<2x1xf32>
    %261 = vector.broadcast %260 : vector<2x1xf32> to vector<2x32xf32>
    %262 = arith.mulf %255, %261 : vector<2x32xf32>
    %263 = vector.broadcast %243 : vector<1x32xf32> to vector<2x32xf32>
    %264 = arith.mulf %262, %263 : vector<2x32xf32>
    %265 = vector.broadcast %244 : vector<1x32xf32> to vector<2x32xf32>
    %266 = arith.addf %264, %265 : vector<2x32xf32>
    %267 = arith.truncf %266 : vector<2x32xf32> to vector<2x32xbf16>
    %c512 = arith.constant 512 : index
    %c0_85 = arith.constant 0 : index
    %268 = vector.load %arg1[%c512, %c0_85] : memref<584x128xbf16, #tpu.memory_space<vmem>>, vector<32x16xbf16>
    %cst_86 = arith.constant dense<0.000000e+00> : vector<2x16xf32>
    %269 = tpu.matmul %267, %268, %cst_86 {dimension_numbers = #tpu.dot_dimension_numbers<[1], [0], [0], [1], [0, 0, 1, 1], [], []>} : vector<2x32xbf16>, vector<32x16xbf16>, vector<2x16xf32> -> vector<2x16xf32>
    %cst_87 = arith.constant 0.000000e+00 : f32
    %270 = vector.broadcast %cst_87 : f32 to vector<10x96xf32>
    %271 = tpu.concatenate %239, %270 in 1 : vector<10x32xf32>, vector<10x96xf32> -> vector<10x128xf32>
    %cst_88 = arith.constant 0.000000e+00 : f32
    %272 = vector.broadcast %cst_88 : f32 to vector<2x112xf32>
    %273 = tpu.concatenate %269, %272 in 1 : vector<2x16xf32>, vector<2x112xf32> -> vector<2x128xf32>
    %cst_89 = arith.constant 0.000000e+00 : f32
    %274 = vector.broadcast %cst_89 : f32 to vector<4x128xf32>
    %275 = tpu.concatenate %271, %273, %274 in 0 : vector<10x128xf32>, vector<2x128xf32>, vector<4x128xf32> -> vector<16x128xf32>
    %c0_90 = arith.constant 0 : index
    %c0_91 = arith.constant 0 : index
    %276 = vector.load %arg3[%c0_90, %c0_91] : memref<16x128xf32, #tpu.memory_space<vmem>>, vector<16x128xf32>
    tpu.vector_store %arg3[%c0_90, %c0_91], %275 {strides = array<i32>} : memref<16x128xf32, #tpu.memory_space<vmem>>, vector<16x128xf32>,
    return
  }
}

</mosaic_0001>

<llo_original>
// kernel: clip_encoder_forward.1
$region0: #{clip_encoder_forward.1}
  #allocation0 [shape = 'u32[]', space=smem, size = 0x4, offset = 0x4, fixed_abs, tag = 'smem constant byte address 0x4 - core index']
  #allocation1 [shape = 'u32[144,128]{1,0:T(1,128)}', space=vmem, size = 0x12000, scoped, tag = 'internal scratch']
  %s0 = inlined_call_operand.vmem [shape: f32[10,192], index: 0, kind: input, shape index: {}]
  %s1 = inlined_call_operand.vmem [shape: bf16[584,128], index: 1, kind: input, shape index: {}]
  %s2 = inlined_call_operand.vmem [shape: f32[56,128], index: 2, kind: input, shape index: {}]
  %s3 = inlined_call_operand.vmem [shape: f32[16,128], index: 3, kind: output, shape index: {}]
  %s4 = sld [smem:[#allocation0]]
  $region22: #{clip_encoder_forward.1} parent=0
    _
  %s6 = ssub.s32 1, %s4
  %s7 = scalar_select 0, %s6, %s4
  // Predicated region
  $region2: #{clip_encoder_forward.1} parent=0 // pred_check
    _
  $region3: #{clip_encoder_forward.1} parent=0 // pred_check_branch
    %9 = sbr.rel (0) target = $region5
  $region4: #{clip_encoder_forward.1} parent=0 // pred_region
    _
  $region5: #{clip_encoder_forward.1} parent=0 // pred_fallthru
    _
  // Predicated region
  $region6: #{clip_encoder_forward.1} parent=0 // pred_check
    _
  $region7: #{clip_encoder_forward.1} parent=0 // pred_check_branch
    %11 = sbr.rel (0) target = $region9
  $region8: #{clip_encoder_forward.1} parent=0 // pred_region
    _
  $region9: #{clip_encoder_forward.1} parent=0 // pred_fallthru
    _
  // Predicated region
  $region10: #{clip_encoder_forward.1} parent=0 // pred_check
    _
  $region11: #{clip_encoder_forward.1} parent=0 // pred_check_branch
    %13 = sbr.rel (0) target = $region13
  $region12: #{clip_encoder_forward.1} parent=0 // pred_region
    _
  $region13: #{clip_encoder_forward.1} parent=0 // pred_fallthru
    _
  %v15 = vld [vmem:[%s1 + $0x110] sm:$0xf]
  %v16 = vld [vmem:[%s1 + $0x114] sm:$0xf]
  %v17 = vld [vmem:[%s1 + $0x118] sm:$0xf]
  %v18 = vld [vmem:[%s1 + $0x11c] sm:$0xf]
  %v19 = vld [vmem:[%s1 + $0x120] sm:$0xf]
  %v20 = vld [vmem:[%s2 + $0x28] sm:$0xff]
  %v21 = vld [vmem:[%s2 + $0x30] sm:$0x3]
  %v22 = vld [vmem:[%s0] sm:$0xff]
  %v23 = vld [vmem:[%s0 + $0x8] sm:$0xff]
  %v24 = vld [vmem:[%s0 + $0x10] sm:$0x3]
  %v25 = vld [vmem:[%s0 + $0x18] sm:$0x3]
  %v26 = vpack.c.bf16 %v24, %v22
  %v27 = vpack.c.bf16 %v25, %v23
  %v28 = vld [vmem:[%s1] sm:$0xf]
  %v29 = vld [vmem:[%s1 + $0x4] sm:$0xf]
  %v30 = vld [vmem:[%s1 + $0x8] sm:$0xf]
  %v31 = vld [vmem:[%s1 + $0xc] sm:$0xf]
  %v32 = vld [vmem:[%s1 + $0x10] sm:$0xf]
  %v33 = vld [vmem:[%s1 + $0x14] sm:$0xf]
  %v34 = vld [vmem:[%s1 + $0x18] sm:$0xf]
  %v35 = vld [vmem:[%s1 + $0x1c] sm:$0xf]
  %v36 = vld [vmem:[%s1 + $0x20] sm:$0xf]
  %v37 = vld [vmem:[%s1 + $0x24] sm:$0xf]
  %v38 = vld [vmem:[%s1 + $0x28] sm:$0xf]
  %v39 = vld [vmem:[%s1 + $0x2c] sm:$0xf]
  %v40 = vld [vmem:[%s1 + $0x30] sm:$0xf]
  %v41 = vld [vmem:[%s1 + $0x34] sm:$0xf]
  %v42 = vld [vmem:[%s1 + $0x38] sm:$0xf]
  %v43 = vld [vmem:[%s1 + $0x3c] sm:$0xf]
  %v44 = vld [vmem:[%s1 + $0x40] sm:$0xf]
  %v45 = vld [vmem:[%s1 + $0x44] sm:$0xf]
  %v46 = vld [vmem:[%s1 + $0x48] sm:$0xf]
  %v47 = vld [vmem:[%s1 + $0x4c] sm:$0xf]
  %v48 = vld [vmem:[%s1 + $0x50] sm:$0xf]
  %v49 = vld [vmem:[%s1 + $0x54] sm:$0xf]
  %v50 = vld [vmem:[%s1 + $0x58] sm:$0xf]
  %v51 = vld [vmem:[%s1 + $0x5c] sm:$0xf]
  %v52 = vld [vmem:[%s2] sm:$0xff]
  %v53 = vld [vmem:[%s2 + $0x8] sm:$0x3]
  %v78 = vunpack.c.l.b16 %v28
  %v79 = vunpack.c.l.b16 %v29
  %v80 = vunpack.c.l.b16 %v30
  %v81 = vunpack.c.l.b16 %v31
  %v82 = vunpack.c.l.b16 %v32
  %v83 = vunpack.c.l.b16 %v33
  %v84 = vunpack.c.l.b16 %v34
  %v85 = vunpack.c.l.b16 %v35
  %v86 = vunpack.c.l.b16 %v36
  %v87 = vunpack.c.l.b16 %v37
  %v88 = vunpack.c.l.b16 %v38
  %v89 = vunpack.c.l.b16 %v39
  %v90 = vunpack.c.l.b16 %v40
  %v91 = vunpack.c.l.b16 %v41
  %v92 = vunpack.c.l.b16 %v42
  %v93 = vunpack.c.l.b16 %v43
  %v94 = vunpack.c.l.b16 %v44
  %v95 = vunpack.c.l.b16 %v45
  %v96 = vunpack.c.l.b16 %v46
  %v97 = vunpack.c.l.b16 %v47
  %v98 = vunpack.c.l.b16 %v48
  %v99 = vunpack.c.l.b16 %v49
  %v100 = vunpack.c.l.b16 %v50
  %v101 = vunpack.c.l.b16 %v51
  %v102 = vpack.c.b16 %v79, %v78
  %v103 = vpack.c.b16 %v81, %v80
  %v104 = vpack.c.b16 %v83, %v82
  %v105 = vpack.c.b16 %v85, %v84
  %v106 = vpack.c.b16 %v87, %v86
  %v107 = vpack.c.b16 %v89, %v88
  %v108 = vpack.c.b16 %v91, %v90
  %v109 = vpack.c.b16 %v93, %v92
  %v110 = vpack.c.b16 %v95, %v94
  %v111 = vpack.c.b16 %v97, %v96
  %v112 = vpack.c.b16 %v99, %v98
  %v113 = vpack.c.b16 %v101, %v100
  %vm126 = vcmask 523264
  %v128 = vsel %vm126, %v27, 0
  %130 = vmatprep.subr.bf16.mxu0 0
  %131 = vmatpush1.bf16.msra.mxu0 %v102
  %132 = vmatprep.subr.bf16.mxu0 0
  %133 = vmatpush1.bf16.msra.mxu0 %v103
  %134 = vmatprep.subr.bf16.mxu0 0
  %135 = vmatpush1.bf16.msra.mxu0 %v104
  %136 = vmatprep.subr.bf16.mxu0 0
  %137 = vmatpush1.bf16.msra.mxu0 %v105
  %138 = vmatprep.subr.bf16.mxu0 0
  %139 = vmatpush1.bf16.msra.mxu0 %v106
  %140 = vmatprep.subr.bf16.mxu0 0
  %141 = vmatpush1.bf16.msra.mxu0 %v107
  %142 = vmatprep.subr.bf16.mxu0 0
  %143 = vmatpush1.bf16.msra.mxu0 %v108
  %144 = vmatprep.subr.bf16.mxu0 0
  %145 = vmatpush1.bf16.msra.mxu0 %v109
  %146 = vmatprep.subr.bf16.mxu0 0
  %147 = vmatpush1.bf16.msra.mxu0 %v110
  %148 = vmatprep.subr.bf16.mxu0 0
  %149 = vmatpush1.bf16.msra.mxu0 %v111
  %150 = vmatprep.subr.bf16.mxu0 0
  %151 = vmatpush1.bf16.msra.mxu0 %v112
  %152 = vmatprep.subr.bf16.mxu0 0
  %153 = vmatpush1.bf16.msra.mxu0 %v113
  %154 = vmatprep.subr.bf16.mxu0 0
  %155 = vmatpush1.bf16.msra.mxu0 0
  %156 = vmatprep.subr.bf16.mxu0 0
  %157 = vmatpush1.bf16.msra.mxu0 0
  %158 = vmatprep.subr.bf16.mxu0 0
  %159 = vmatpush1.bf16.msra.mxu0 0
  %160 = vmatprep.subr.bf16.mxu0 0
  %161 = vmatpush1.bf16.msra.mxu0 0
  %162 = vmatprep.mubr.bf16.mxu0 %v128
  %163 = vmatmul.mubr.bf16.gmra.mrb[0].mxu0 %v26
  %v164 = vpop.f32.mrb[0].mxu0
  %v165 = vadd.f32 %v52, %v164
  %v166 = vpop.f32.mrb[0].mxu0
  %v167 = vpop.f32.mrb[0].mxu0
  %v168 = vadd.f32 %v53, %v167
  %v169 = vpop.f32.mrb[0].mxu0
  %170 = vdwg.mxu0
  %v171 = vld [vmem:[%s2 + $0x10] sm:$0x1]
  %v172 = vld [vmem:[%s2 + $0x11] sm:$0x1]
  %vm173 = vcmask 261120
  %v174 = vsel %vm173, %v165, 0.0
  %175 = vadd.xlane.f32.xlu0 %v174
  %v176 = vpop.xlane.xlu0 %175
  %vm177 = vcmask 254976
  %v178 = vsel %vm177, %v168, 0.0
  %179 = vadd.xlane.f32.xlu0 %v178
  %v180 = vpop.xlane.xlu0 %179
  %v181 = vrcp.pop 32.0
  %v182 = vmul.f32 %v176, %v181
  %v183 = vmul.f32 %v180, %v181
  %v184 = vmul.f32 %v165, %v165
  %v185 = vmul.f32 %v168, %v168
  %v186 = vsel %vm173, %v184, 0.0
  %187 = vadd.xlane.f32.xlu0 %v186
  %v188 = vpop.xlane.xlu0 %187
  %v189 = vsel %vm177, %v185, 0.0
  %190 = vadd.xlane.f32.xlu0 %v189
  %v191 = vpop.xlane.xlu0 %190
  %v192 = vmul.f32 %v188, %v181
  %v193 = vmul.f32 %v191, %v181
  %v194 = vsub.f32 %v165, %v182
  %v195 = vsub.f32 %v168, %v183
  %v196 = vmul.f32 %v182, %v182
  %v197 = vmul.f32 %v183, %v183
  %v198 = vsub.f32 %v192, %v196
  %v199 = vsub.f32 %v193, %v197
  %v200 = vadd.f32 %v198, 1e-05
  %v201 = vadd.f32 %v199, 1e-05
  %v202 = vrsqrt.pop %v200
  %v203 = vrsqrt.pop %v201
  %v204 = vmul.f32 %v194, %v202
  %v205 = vmul.f32 %v195, %v203
  %v206 = vlaneseq
  %v207 = vshrl.u32 %v206, 7
  %v208 = vsub.s32 0, %v207
  %v209 = vrot.slane %v171, %v208
  %v210 = vmul.f32 %v204, %v209
  %v211 = vmul.f32 %v205, %v209
  %v212 = vlaneseq
  %v213 = vshrl.u32 %v212, 7
  %v214 = vsub.s32 0, %v213
  %v215 = vrot.slane %v172, %v214
  %v216 = vadd.f32 %v210, %v215
  %v217 = vadd.f32 %v211, %v215
  %v218 = vld [vmem:[%s2 + $0x18] sm:$0x1]
  %v219 = vld [vmem:[%s2 + $0x19] sm:$0x1]
  %v220 = vsel %vm173, %v216, 0.0
  %221 = vadd.xlane.f32.xlu0 %v220
  %v222 = vpop.xlane.xlu0 %221
  %v223 = vsel %vm177, %v217, 0.0
  %224 = vadd.xlane.f32.xlu0 %v223
  %v225 = vpop.xlane.xlu0 %224
  %v226 = vmul.f32 %v222, %v181
  %v227 = vmul.f32 %v225, %v181
  %v228 = vmul.f32 %v216, %v216
  %v229 = vmul.f32 %v217, %v217
  %v230 = vsel %vm173, %v228, 0.0
  %231 = vadd.xlane.f32.xlu0 %v230
  %v232 = vpop.xlane.xlu0 %231
  %v233 = vsel %vm177, %v229, 0.0
  %234 = vadd.xlane.f32.xlu0 %v233
  %v235 = vpop.xlane.xlu0 %234
  %v236 = vmul.f32 %v232, %v181
  %v237 = vmul.f32 %v235, %v181
  %v238 = vsub.f32 %v216, %v226
  %v239 = vsub.f32 %v217, %v227
  %v240 = vmul.f32 %v226, %v226
  %v241 = vmul.f32 %v227, %v227
  %v242 = vsub.f32 %v236, %v240
  %v243 = vsub.f32 %v237, %v241
  %v244 = vadd.f32 %v242, 1e-05
  %v245 = vadd.f32 %v243, 1e-05
  %v246 = vrsqrt.pop %v244
  %v247 = vrsqrt.pop %v245
  %v248 = vmul.f32 %v238, %v246
  %v249 = vmul.f32 %v239, %v247
  %v250 = vlaneseq
  %v251 = vshrl.u32 %v250, 7
  %v252 = vsub.s32 0, %v251
  %v253 = vrot.slane %v218, %v252
  %v254 = vmul.f32 %v248, %v253
  %v255 = vmul.f32 %v249, %v253
  %v256 = vlaneseq
  %v257 = vshrl.u32 %v256, 7
  %v258 = vsub.s32 0, %v257
  %v259 = vrot.slane %v219, %v258
  %v260 = vadd.f32 %v254, %v259
  %v261 = vadd.f32 %v255, %v259
  %v262 = vpack.c.bf16 %v261, %v260
  %v263 = vld [vmem:[%s1 + $0x60] sm:$0xf]
  %v264 = vld [vmem:[%s1 + $0x64] sm:$0xf]
  %v265 = vld [vmem:[%s1 + $0x68] sm:$0xf]
  %v266 = vld [vmem:[%s1 + $0x6c] sm:$0xf]
  %v267 = vld [vmem:[%s2 + $0x1c] sm:$0x1]
  %v268 = vlaneseq
  %v269 = vshrl.u32 %v268, 7
  %v270 = vsub.s32 0, %v269
  %v271 = vrot.slane %v267, %v270
  %v276 = vunpack.c.l.b16 %v263
  %v277 = vunpack.c.l.b16 %v264
  %v278 = vunpack.c.l.b16 %v265
  %v279 = vunpack.c.l.b16 %v266
  %v280 = vpack.c.b16 %v277, %v276
  %v281 = vpack.c.b16 %v279, %v278
  %v285 = vsel %vm173, %v262, 0
  %287 = vmatprep.subr.bf16.mxu0 0
  %288 = vmatpush1.bf16.msra.mxu0 %v280
  %289 = vmatprep.subr.bf16.mxu0 0
  %290 = vmatpush1.bf16.msra.mxu0 %v281
  %291 = vmatprep.subr.bf16.mxu0 0
  %292 = vmatpush1.bf16.msra.mxu0 0
  %293 = vmatprep.subr.bf16.mxu0 0
  %294 = vmatpush1.bf16.msra.mxu0 0
  %295 = vmatprep.subr.bf16.mxu0 0
  %296 = vmatpush1.bf16.msra.mxu0 0
  %297 = vmatprep.subr.bf16.mxu0 0
  %298 = vmatpush1.bf16.msra.mxu0 0
  %299 = vmatprep.subr.bf16.mxu0 0
  %300 = vmatpush1.bf16.msra.mxu0 0
  %301 = vmatprep.subr.bf16.mxu0 0
  %302 = vmatpush1.bf16.msra.mxu0 0
  %303 = vmatprep.subr.bf16.mxu0 0
  %304 = vmatpush1.bf16.msra.mxu0 0
  %305 = vmatprep.subr.bf16.mxu0 0
  %306 = vmatpush1.bf16.msra.mxu0 0
  %307 = vmatprep.subr.bf16.mxu0 0
  %308 = vmatpush1.bf16.msra.mxu0 0
  %309 = vmatprep.subr.bf16.mxu0 0
  %310 = vmatpush1.bf16.msra.mxu0 0
  %311 = vmatprep.subr.bf16.mxu0 0
  %312 = vmatpush1.bf16.msra.mxu0 0
  %313 = vmatprep.subr.bf16.mxu0 0
  %314 = vmatpush1.bf16.msra.mxu0 0
  %315 = vmatprep.subr.bf16.mxu0 0
  %316 = vmatpush1.bf16.msra.mxu0 0
  %317 = vmatprep.subr.bf16.mxu0 0
  %318 = vmatpush1.bf16.msra.mxu0 0
  %319 = vmatprep.mubr.bf16.mxu0 0
  %320 = vmatmul.mubr.bf16.gmra.mrb[0].mxu0 %v285
  %v321 = vpop.f32.mrb[0].mxu0
  %v322 = vadd.f32 %v271, %v321
  %v323 = vpop.f32.mrb[0].mxu0
  %v324 = vpop.f32.mrb[0].mxu0
  %v325 = vadd.f32 %v271, %v324
  %v326 = vpop.f32.mrb[0].mxu0
  %327 = vdwg.mxu0
  %v328 = vpack.c.bf16 %v325, %v322
  %v330 = vrot.slane %v328, 3
  %v331 = vrot.slane %v328, 6
  %v332 = vrot.slane %v328, 1
  %vm334 = vcmask 1044480
  %v337 = vsel %vm334, %v328, %v330
  %vm339 = vcmask 1041408
  %v341 = vsel %vm339, %v330, %v331
  %vm342 = vcmask 1046528
  %v344 = vsel %vm342, %v341, %v332
  %v351 = vunpack.c.l.b16 %v15
  %v352 = vunpack.c.l.b16 %v16
  %v353 = vunpack.c.l.b16 %v17
  %v354 = vunpack.c.l.b16 %v18
  %v355 = vunpack.c.l.b16 %v19
  %v356 = vpack.c.b16 %v352, %v351
  %v357 = vpack.c.b16 %v354, %v353
  %v358 = vpack.c.b16 %v355, %v355
  %359 = vrot.lane.b32.xlu0 %v356, 32
  %v360 = vpop.permute.xlu0 %359
  %361 = vrot.lane.b32.xlu0 %v357, 32
  %v362 = vpop.permute.xlu0 %361
  %363 = vrot.lane.b32.xlu0 %v358, 32
  %v364 = vpop.permute.xlu0 %363
  %v368 = vmul.bf16 %v337, %v360
  %v369 = vmul.bf16 %v344, %v362
  %v370 = vmul.bf16 %v332, %v364
  %371 = vrot.lane.b32.xlu0 %v356, 64
  %v372 = vpop.permute.xlu0 %371
  %373 = vrot.lane.b32.xlu0 %v357, 64
  %v374 = vpop.permute.xlu0 %373
  %375 = vrot.lane.b32.xlu0 %v358, 64
  %v376 = vpop.permute.xlu0 %375
  %v380 = vmul.bf16 %v337, %v372
  %v381 = vmul.bf16 %v344, %v374
  %v382 = vmul.bf16 %v332, %v376
  %386 = vrot.lane.b32.xlu0 %v368, 96
  %v387 = vpop.permute.xlu0 %386
  %388 = vrot.lane.b32.xlu0 %v369, 96
  %v389 = vpop.permute.xlu0 %388
  %390 = vrot.lane.b32.xlu0 %v370, 96
  %v391 = vpop.permute.xlu0 %390
  %v392 = vsel %vm173, %v328, 0
  %v395 = vsel %vm173, %v387, 0
  %v398 = vsel %vm173, %v389, 0
  %v401 = vsel %vm173, %v391, 0
  %403 = vmatprep.subr.bf16.mxu0 0
  %404 = vmatpush1.bf16.xpose.msra.mxu0 %v395
  %405 = vmatprep.subr.bf16.mxu0 0
  %406 = vmatpush1.bf16.xpose.msra.mxu0 %v398
  %407 = vmatprep.subr.bf16.mxu0 0
  %408 = vmatpush1.bf16.xpose.msra.mxu0 %v401
  %409 = vmatprep.subr.bf16.mxu0 0
  %410 = vmatpush1.bf16.xpose.msra.mxu0 0
  %411 = vmatprep.subr.bf16.mxu0 0
  %412 = vmatpush1.bf16.xpose.msra.mxu0 0
  %413 = vmatprep.subr.bf16.mxu0 0
  %414 = vmatpush1.bf16.xpose.msra.mxu0 0
  %415 = vmatprep.subr.bf16.mxu0 0
  %416 = vmatpush1.bf16.xpose.msra.mxu0 0
  %417 = vmatprep.subr.bf16.mxu0 0
  %418 = vmatpush1.bf16.xpose.msra.mxu0 0
  %419 = vmatprep.subr.bf16.mxu0 0
  %420 = vmatpush1.bf16.xpose.msra.mxu0 0
  %421 = vmatprep.subr.bf16.mxu0 0
  %422 = vmatpush1.bf16.xpose.msra.mxu0 0
  %423 = vmatprep.subr.bf16.mxu0 0
  %424 = vmatpush1.bf16.xpose.msra.mxu0 0
  %425 = vmatprep.subr.bf16.mxu0 0
  %426 = vmatpush1.bf16.xpose.msra.mxu0 0
  %427 = vmatprep.subr.bf16.mxu0 0
  %428 = vmatpush1.bf16.xpose.msra.mxu0 0
  %429 = vmatprep.subr.bf16.mxu0 0
  %430 = vmatpush1.bf16.xpose.msra.mxu0 0
  %431 = vmatprep.subr.bf16.mxu0 0
  %432 = vmatpush1.bf16.xpose.msra.mxu0 0
  %433 = vmatprep.subr.bf16.mxu0 0
  %434 = vmatpush1.bf16.xpose.msra.mxu0 0
  %435 = vmatprep.mubr.bf16.mxu0 0
  %436 = vmatmul.mubr.bf16.gmra.mrb[0].mxu0 %v392
  %v437 = vpop.f32.mrb[0].mxu0
  %v438 = vadd.f32 %v20, %v437
  %v439 = vpop.f32.mrb[0].mxu0
  %v440 = vpop.f32.mrb[0].mxu0
  %v441 = vadd.f32 %v21, %v440
  %v442 = vpop.f32.mrb[0].mxu0
  %443 = vdwg.mxu0
  %vm444 = vcmask 326656
  %v445 = vsel %vm444, %v438, -inf
  %446 = vmax.xlane.f32.xlu0 %v445
  %v447 = vpop.xlane.xlu0 %446
  %vm448 = vcmask 320512
  %v449 = vsel %vm448, %v441, -inf
  %450 = vmax.xlane.f32.xlu0 %v449
  %v451 = vpop.xlane.xlu0 %450
  %v452 = vsub.f32 %v438, %v447
  %v453 = vsub.f32 %v441, %v451
  %v454 = vmul.f32 %v452, 1.442695
  %v455 = vpow.pop %v454
  %v456 = vmul.f32 %v453, 1.442695
  %v457 = vpow.pop %v456
  %v458 = vpack.c.bf16 %v457, %v455
  %v462 = vsel %vm444, %v458, 0
  %vm464 = vcmask 1043456
  %v466 = vsel %vm464, %v358, 0
  %468 = vmatprep.subr.bf16.mxu0 0
  %469 = vmatpush1.bf16.msra.mxu0 %v356
  %470 = vmatprep.subr.bf16.mxu0 0
  %471 = vmatpush1.bf16.msra.mxu0 %v357
  %472 = vmatprep.subr.bf16.mxu0 0
  %473 = vmatpush1.bf16.msra.mxu0 %v466
  %474 = vmatprep.subr.bf16.mxu0 0
  %475 = vmatpush1.bf16.msra.mxu0 0
  %476 = vmatprep.subr.bf16.mxu0 0
  %477 = vmatpush1.bf16.msra.mxu0 0
  %478 = vmatprep.subr.bf16.mxu0 0
  %479 = vmatpush1.bf16.msra.mxu0 0
  %480 = vmatprep.subr.bf16.mxu0 0
  %481 = vmatpush1.bf16.msra.mxu0 0
  %482 = vmatprep.subr.bf16.mxu0 0
  %483 = vmatpush1.bf16.msra.mxu0 0
  %484 = vmatprep.subr.bf16.mxu0 0
  %485 = vmatpush1.bf16.msra.mxu0 0
  %486 = vmatprep.subr.bf16.mxu0 0
  %487 = vmatpush1.bf16.msra.mxu0 0
  %488 = vmatprep.subr.bf16.mxu0 0
  %489 = vmatpush1.bf16.msra.mxu0 0
  %490 = vmatprep.subr.bf16.mxu0 0
  %491 = vmatpush1.bf16.msra.mxu0 0
  %492 = vmatprep.subr.bf16.mxu0 0
  %493 = vmatpush1.bf16.msra.mxu0 0
  %494 = vmatprep.subr.bf16.mxu0 0
  %495 = vmatpush1.bf16.msra.mxu0 0
  %496 = vmatprep.subr.bf16.mxu0 0
  %497 = vmatpush1.bf16.msra.mxu0 0
  %498 = vmatprep.subr.bf16.mxu0 0
  %499 = vmatpush1.bf16.msra.mxu0 0
  %500 = vmatprep.mubr.bf16.mxu0 0
  %501 = vmatmul.mubr.bf16.gmra.mrb[0].mxu0 %v462
  %v502 = vpop.f32.mrb[0].mxu0
  %v503 = vadd.f32 0.0, %v502
  %v504 = vpop.f32.mrb[0].mxu0
  %v505 = vpop.f32.mrb[0].mxu0
  %v506 = vadd.f32 0.0, %v505
  %v507 = vpop.f32.mrb[0].mxu0
  %508 = vdwg.mxu0
  %512 = vrot.lane.b32.xlu0 %v380, 64
  %v513 = vpop.permute.xlu0 %512
  %514 = vrot.lane.b32.xlu0 %v381, 64
  %v515 = vpop.permute.xlu0 %514
  %516 = vrot.lane.b32.xlu0 %v382, 64
  %v517 = vpop.permute.xlu0 %516
  %v521 = vsel %vm464, %v517, 0
  %523 = vmatprep.subr.bf16.mxu0 0
  %524 = vmatpush1.bf16.msra.mxu0 %v513
  %525 = vmatprep.subr.bf16.mxu0 0
  %526 = vmatpush1.bf16.msra.mxu0 %v515
  %527 = vmatprep.subr.bf16.mxu0 0
  %528 = vmatpush1.bf16.msra.mxu0 %v521
  %529 = vmatprep.subr.bf16.mxu0 0
  %530 = vmatpush1.bf16.msra.mxu0 0
  %531 = vmatprep.subr.bf16.mxu0 0
  %532 = vmatpush1.bf16.msra.mxu0 0
  %533 = vmatprep.subr.bf16.mxu0 0
  %534 = vmatpush1.bf16.msra.mxu0 0
  %535 = vmatprep.subr.bf16.mxu0 0
  %536 = vmatpush1.bf16.msra.mxu0 0
  %537 = vmatprep.subr.bf16.mxu0 0
  %538 = vmatpush1.bf16.msra.mxu0 0
  %539 = vmatprep.subr.bf16.mxu0 0
  %540 = vmatpush1.bf16.msra.mxu0 0
  %541 = vmatprep.subr.bf16.mxu0 0
  %542 = vmatpush1.bf16.msra.mxu0 0
  %543 = vmatprep.subr.bf16.mxu0 0
  %544 = vmatpush1.bf16.msra.mxu0 0
  %545 = vmatprep.subr.bf16.mxu0 0
  %546 = vmatpush1.bf16.msra.mxu0 0
  %547 = vmatprep.subr.bf16.mxu0 0
  %548 = vmatpush1.bf16.msra.mxu0 0
  %549 = vmatprep.subr.bf16.mxu0 0
  %550 = vmatpush1.bf16.msra.mxu0 0
  %551 = vmatprep.subr.bf16.mxu0 0
  %552 = vmatpush1.bf16.msra.mxu0 0
  %553 = vmatprep.subr.bf16.mxu0 0
  %554 = vmatpush1.bf16.msra.mxu0 0
  %555 = vmatprep.mubr.bf16.mxu0 0
  %556 = vmatmul.mubr.bf16.gmra.mrb[0].mxu0 %v462
  %v557 = vpop.f32.mrb[0].mxu0
  %v558 = vadd.f32 0.0, %v557
  %v559 = vpop.f32.mrb[0].mxu0
  %v560 = vpop.f32.mrb[0].mxu0
  %v561 = vadd.f32 0.0, %v560
  %v562 = vpop.f32.mrb[0].mxu0
  %563 = vdwg.mxu0
  %v564 = vrcp.pop %v503
  %v565 = vrcp.pop %v506
  %v566 = vmul.f32 %v558, %v564
  %v567 = vmul.f32 %v561, %v565
  %v568 = vpack.c.bf16 %v567, %v566
  %v569 = vld [vmem:[%s1 + $0x80] sm:$0xf]
  %v570 = vld [vmem:[%s1 + $0x84] sm:$0xf]
  %v571 = vld [vmem:[%s1 + $0x88] sm:$0xf]
  %v572 = vld [vmem:[%s1 + $0x8c] sm:$0xf]
  %v573 = vld [vmem:[%s2 + $0x1d] sm:$0x1]
  %v574 = vlaneseq
  %v575 = vshrl.u32 %v574, 7
  %v576 = vsub.s32 0, %v575
  %v577 = vrot.slane %v573, %v576
  %v582 = vunpack.c.l.b16 %v569
  %v583 = vunpack.c.l.b16 %v570
  %v584 = vunpack.c.l.b16 %v571
  %v585 = vunpack.c.l.b16 %v572
  %v586 = vpack.c.b16 %v583, %v582
  %v587 = vpack.c.b16 %v585, %v584
  %v591 = vsel %vm173, %v568, 0
  %593 = vmatprep.subr.bf16.mxu0 0
  %594 = vmatpush1.bf16.msra.mxu0 %v586
  %595 = vmatprep.subr.bf16.mxu0 0
  %596 = vmatpush1.bf16.msra.mxu0 %v587
  %597 = vmatprep.subr.bf16.mxu0 0
  %598 = vmatpush1.bf16.msra.mxu0 0
  %599 = vmatprep.subr.bf16.mxu0 0
  %600 = vmatpush1.bf16.msra.mxu0 0
  %601 = vmatprep.subr.bf16.mxu0 0
  %602 = vmatpush1.bf16.msra.mxu0 0
  %603 = vmatprep.subr.bf16.mxu0 0
  %604 = vmatpush1.bf16.msra.mxu0 0
  %605 = vmatprep.subr.bf16.mxu0 0
  %606 = vmatpush1.bf16.msra.mxu0 0
  %607 = vmatprep.subr.bf16.mxu0 0
  %608 = vmatpush1.bf16.msra.mxu0 0
  %609 = vmatprep.subr.bf16.mxu0 0
  %610 = vmatpush1.bf16.msra.mxu0 0
  %611 = vmatprep.subr.bf16.mxu0 0
  %612 = vmatpush1.bf16.msra.mxu0 0
  %613 = vmatprep.subr.bf16.mxu0 0
  %614 = vmatpush1.bf16.msra.mxu0 0
  %615 = vmatprep.subr.bf16.mxu0 0
  %616 = vmatpush1.bf16.msra.mxu0 0
  %617 = vmatprep.subr.bf16.mxu0 0
  %618 = vmatpush1.bf16.msra.mxu0 0
  %619 = vmatprep.subr.bf16.mxu0 0
  %620 = vmatpush1.bf16.msra.mxu0 0
  %621 = vmatprep.subr.bf16.mxu0 0
  %622 = vmatpush1.bf16.msra.mxu0 0
  %623 = vmatprep.subr.bf16.mxu0 0
  %624 = vmatpush1.bf16.msra.mxu0 0
  %625 = vmatprep.mubr.bf16.mxu0 0
  %626 = vmatmul.mubr.bf16.gmra.mrb[0].mxu0 %v591
  %v627 = vpop.f32.mrb[0].mxu0
  %v628 = vadd.f32 %v577, %v627
  %v629 = vpop.f32.mrb[0].mxu0
  %v630 = vpop.f32.mrb[0].mxu0
  %v631 = vadd.f32 %v577, %v630
  %v632 = vpop.f32.mrb[0].mxu0
  %633 = vdwg.mxu0
  %v634 = vadd.f32 %v216, %v628
  %v635 = vadd.f32 %v217, %v631
  %v636 = vld [vmem:[%s2 + $0x1a] sm:$0x1]
  %v637 = vld [vmem:[%s2 + $0x1b] sm:$0x1]
  %v638 = vsel %vm173, %v634, 0.0
  %639 = vadd.xlane.f32.xlu0 %v638
  %v640 = vpop.xlane.xlu0 %639
  %v641 = vsel %vm177, %v635, 0.0
  %642 = vadd.xlane.f32.xlu0 %v641
  %v643 = vpop.xlane.xlu0 %642
  %v644 = vmul.f32 %v640, %v181
  %v645 = vmul.f32 %v643, %v181
  %v646 = vmul.f32 %v634, %v634
  %v647 = vmul.f32 %v635, %v635
  %v648 = vsel %vm173, %v646, 0.0
  %649 = vadd.xlane.f32.xlu0 %v648
  %v650 = vpop.xlane.xlu0 %649
  %v651 = vsel %vm177, %v647, 0.0
  %652 = vadd.xlane.f32.xlu0 %v651
  %v653 = vpop.xlane.xlu0 %652
  %v654 = vmul.f32 %v650, %v181
  %v655 = vmul.f32 %v653, %v181
  %v656 = vsub.f32 %v634, %v644
  %v657 = vsub.f32 %v635, %v645
  %v658 = vmul.f32 %v644, %v644
  %v659 = vmul.f32 %v645, %v645
  %v660 = vsub.f32 %v654, %v658
  %v661 = vsub.f32 %v655, %v659
  %v662 = vadd.f32 %v660, 1e-05
  %v663 = vadd.f32 %v661, 1e-05
  %v664 = vrsqrt.pop %v662
  %v665 = vrsqrt.pop %v663
  %v666 = vmul.f32 %v656, %v664
  %v667 = vmul.f32 %v657, %v665
  %v668 = vlaneseq
  %v669 = vshrl.u32 %v668, 7
  %v670 = vsub.s32 0, %v669
  %v671 = vrot.slane %v636, %v670
  %v672 = vmul.f32 %v666, %v671
  %v673 = vmul.f32 %v667, %v671
  %v674 = vlaneseq
  %v675 = vshrl.u32 %v674, 7
  %v676 = vsub.s32 0, %v675
  %v677 = vrot.slane %v637, %v676
  %v678 = vadd.f32 %v672, %v677
  %v679 = vadd.f32 %v673, %v677
  %v680 = vpack.c.bf16 %v679, %v678
  %v681 = vld [vmem:[%s1 + $0xa0] sm:$0xf]
  %v682 = vld [vmem:[%s1 + $0xa4] sm:$0xf]
  %v683 = vld [vmem:[%s1 + $0xa8] sm:$0xf]
  %v684 = vld [vmem:[%s1 + $0xac] sm:$0xf]
  %v685 = vld [vmem:[%s2 + $0x1e] sm:$0x1]
  %v686 = vlaneseq
  %v687 = vshrl.u32 %v686, 7
  %v688 = vsub.s32 0, %v687
  %v689 = vrot.slane %v685, %v688
  %v694 = vunpack.c.l.b16 %v681
  %v695 = vunpack.c.l.b16 %v682
  %v696 = vunpack.c.l.b16 %v683
  %v697 = vunpack.c.l.b16 %v684
  %v698 = vpack.c.b16 %v695, %v694
  %v699 = vpack.c.b16 %v697, %v696
  %v703 = vsel %vm173, %v680, 0
  %705 = vmatprep.subr.bf16.mxu0 0
  %706 = vmatpush1.bf16.msra.mxu0 %v698
  %707 = vmatprep.subr.bf16.mxu0 0
  %708 = vmatpush1.bf16.msra.mxu0 %v699
  %709 = vmatprep.subr.bf16.mxu0 0
  %710 = vmatpush1.bf16.msra.mxu0 0
  %711 = vmatprep.subr.bf16.mxu0 0
  %712 = vmatpush1.bf16.msra.mxu0 0
  %713 = vmatprep.subr.bf16.mxu0 0
  %714 = vmatpush1.bf16.msra.mxu0 0
  %715 = vmatprep.subr.bf16.mxu0 0
  %716 = vmatpush1.bf16.msra.mxu0 0
  %717 = vmatprep.subr.bf16.mxu0 0
  %718 = vmatpush1.bf16.msra.mxu0 0
  %719 = vmatprep.subr.bf16.mxu0 0
  %720 = vmatpush1.bf16.msra.mxu0 0
  %721 = vmatprep.subr.bf16.mxu0 0
  %722 = vmatpush1.bf16.msra.mxu0 0
  %723 = vmatprep.subr.bf16.mxu0 0
  %724 = vmatpush1.bf16.msra.mxu0 0
  %725 = vmatprep.subr.bf16.mxu0 0
  %726 = vmatpush1.bf16.msra.mxu0 0
  %727 = vmatprep.subr.bf16.mxu0 0
  %728 = vmatpush1.bf16.msra.mxu0 0
  %729 = vmatprep.subr.bf16.mxu0 0
  %730 = vmatpush1.bf16.msra.mxu0 0
  %731 = vmatprep.subr.bf16.mxu0 0
  %732 = vmatpush1.bf16.msra.mxu0 0
  %733 = vmatprep.subr.bf16.mxu0 0
  %734 = vmatpush1.bf16.msra.mxu0 0
  %735 = vmatprep.subr.bf16.mxu0 0
  %736 = vmatpush1.bf16.msra.mxu0 0
  %737 = vmatprep.mubr.bf16.mxu0 0
  %738 = vmatmul.mubr.bf16.gmra.mrb[0].mxu0 %v703
  %v739 = vpop.f32.mrb[0].mxu0
  %v740 = vadd.f32 %v689, %v739
  %v741 = vpop.f32.mrb[0].mxu0
  %v742 = vpop.f32.mrb[0].mxu0
  %v743 = vadd.f32 %v689, %v742
  %v744 = vpop.f32.mrb[0].mxu0
  %745 = vdwg.mxu0
  %v746 = vmul.f32 %v740, 1.702
  %v747 = vmul.f32 %v743, 1.702
  %v748 = vxor.u32 %v746, 2147483648
  %v749 = vxor.u32 %v747, 2147483648
  %v750 = vmul.f32 %v748, 1.442695
  %v751 = vpow.pop %v750
  %v752 = vmul.f32 %v749, 1.442695
  %v753 = vpow.pop %v752
  %v754 = vadd.f32 %v751, 1.0
  %v755 = vadd.f32 %v753, 1.0
  %v756 = vrcp.pop %v754
  %v757 = vmul.f32 1.0, %v756
  %v758 = vrcp.pop %v755
  %v759 = vmul.f32 1.0, %v758
  %v760 = vmul.f32 %v740, %v757
  %v761 = vmul.f32 %v743, %v759
  %v762 = vpack.c.bf16 %v761, %v760
  %v763 = vld [vmem:[%s1 + $0xc0] sm:$0xf]
  %v764 = vld [vmem:[%s1 + $0xc4] sm:$0xf]
  %v765 = vld [vmem:[%s1 + $0xc8] sm:$0xf]
  %v766 = vld [vmem:[%s1 + $0xcc] sm:$0xf]
  %v767 = vld [vmem:[%s1 + $0xd0] sm:$0xf]
  %v768 = vld [vmem:[%s1 + $0xd4] sm:$0xf]
  %v769 = vld [vmem:[%s1 + $0xd8] sm:$0xf]
  %v770 = vld [vmem:[%s1 + $0xdc] sm:$0xf]
  %v771 = vld [vmem:[%s2 + $0x1f] sm:$0x1]
  %v772 = vlaneseq
  %v773 = vshrl.u32 %v772, 7
  %v774 = vsub.s32 0, %v773
  %v775 = vrot.slane %v771, %v774
  %v784 = vunpack.c.l.b16 %v763
  %v785 = vunpack.c.l.b16 %v764
  %v786 = vunpack.c.l.b16 %v765
  %v787 = vunpack.c.l.b16 %v766
  %v788 = vunpack.c.l.b16 %v767
  %v789 = vunpack.c.l.b16 %v768
  %v790 = vunpack.c.l.b16 %v769
  %v791 = vunpack.c.l.b16 %v770
  %v792 = vpack.c.b16 %v785, %v784
  %v793 = vpack.c.b16 %v787, %v786
  %v794 = vpack.c.b16 %v789, %v788
  %v795 = vpack.c.b16 %v791, %v790
  %v801 = vsel %vm126, %v762, 0
  %803 = vmatprep.subr.bf16.mxu0 0
  %804 = vmatpush1.bf16.msra.mxu0 %v792
  %805 = vmatprep.subr.bf16.mxu0 0
  %806 = vmatpush1.bf16.msra.mxu0 %v793
  %807 = vmatprep.subr.bf16.mxu0 0
  %808 = vmatpush1.bf16.msra.mxu0 %v794
  %809 = vmatprep.subr.bf16.mxu0 0
  %810 = vmatpush1.bf16.msra.mxu0 %v795
  %811 = vmatprep.subr.bf16.mxu0 0
  %812 = vmatpush1.bf16.msra.mxu0 0
  %813 = vmatprep.subr.bf16.mxu0 0
  %814 = vmatpush1.bf16.msra.mxu0 0
  %815 = vmatprep.subr.bf16.mxu0 0
  %816 = vmatpush1.bf16.msra.mxu0 0
  %817 = vmatprep.subr.bf16.mxu0 0
  %818 = vmatpush1.bf16.msra.mxu0 0
  %819 = vmatprep.subr.bf16.mxu0 0
  %820 = vmatpush1.bf16.msra.mxu0 0
  %821 = vmatprep.subr.bf16.mxu0 0
  %822 = vmatpush1.bf16.msra.mxu0 0
  %823 = vmatprep.subr.bf16.mxu0 0
  %824 = vmatpush1.bf16.msra.mxu0 0
  %825 = vmatprep.subr.bf16.mxu0 0
  %826 = vmatpush1.bf16.msra.mxu0 0
  %827 = vmatprep.subr.bf16.mxu0 0
  %828 = vmatpush1.bf16.msra.mxu0 0
  %829 = vmatprep.subr.bf16.mxu0 0
  %830 = vmatpush1.bf16.msra.mxu0 0
  %831 = vmatprep.subr.bf16.mxu0 0
  %832 = vmatpush1.bf16.msra.mxu0 0
  %833 = vmatprep.subr.bf16.mxu0 0
  %834 = vmatpush1.bf16.msra.mxu0 0
  %835 = vmatprep.mubr.bf16.mxu0 0
  %836 = vmatmul.mubr.bf16.gmra.mrb[0].mxu0 %v801
  %v837 = vpop.f32.mrb[0].mxu0
  %v838 = vadd.f32 %v775, %v837
  %v839 = vpop.f32.mrb[0].mxu0
  %v840 = vpop.f32.mrb[0].mxu0
  %v841 = vadd.f32 %v775, %v840
  %v842 = vpop.f32.mrb[0].mxu0
  %843 = vdwg.mxu0
  %v844 = vadd.f32 %v634, %v838
  %v845 = vadd.f32 %v635, %v841
  %v846 = vld [vmem:[%s2 + $0x20] sm:$0x1]
  %v847 = vld [vmem:[%s2 + $0x21] sm:$0x1]
  %v848 = vsel %vm173, %v844, 0.0
  %849 = vadd.xlane.f32.xlu0 %v848
  %v850 = vpop.xlane.xlu0 %849
  %v851 = vsel %vm177, %v845, 0.0
  %852 = vadd.xlane.f32.xlu0 %v851
  %v853 = vpop.xlane.xlu0 %852
  %v854 = vmul.f32 %v850, %v181
  %v855 = vmul.f32 %v853, %v181
  %v856 = vmul.f32 %v844, %v844
  %v857 = vmul.f32 %v845, %v845
  %v858 = vsel %vm173, %v856, 0.0
  %859 = vadd.xlane.f32.xlu0 %v858
  %v860 = vpop.xlane.xlu0 %859
  %v861 = vsel %vm177, %v857, 0.0
  %862 = vadd.xlane.f32.xlu0 %v861
  %v863 = vpop.xlane.xlu0 %862
  %v864 = vmul.f32 %v860, %v181
  %v865 = vmul.f32 %v863, %v181
  %v866 = vsub.f32 %v844, %v854
  %v867 = vsub.f32 %v845, %v855
  %v868 = vmul.f32 %v854, %v854
  %v869 = vmul.f32 %v855, %v855
  %v870 = vsub.f32 %v864, %v868
  %v871 = vsub.f32 %v865, %v869
  %v872 = vadd.f32 %v870, 1e-05
  %v873 = vadd.f32 %v871, 1e-05
  %v874 = vrsqrt.pop %v872
  %v875 = vrsqrt.pop %v873
  %v876 = vmul.f32 %v866, %v874
  %v877 = vmul.f32 %v867, %v875
  %v878 = vlaneseq
  %v879 = vshrl.u32 %v878, 7
  %v880 = vsub.s32 0, %v879
  %v881 = vrot.slane %v846, %v880
  %v882 = vmul.f32 %v876, %v881
  %v883 = vmul.f32 %v877, %v881
  %v884 = vlaneseq
  %v885 = vshrl.u32 %v884, 7
  %v886 = vsub.s32 0, %v885
  %v887 = vrot.slane %v847, %v886
  %v888 = vadd.f32 %v882, %v887
  %v889 = vadd.f32 %v883, %v887
  %v890 = vpack.c.bf16 %v889, %v888
  %v891 = vld [vmem:[%s1 + $0x70] sm:$0xf]
  %v892 = vld [vmem:[%s1 + $0x74] sm:$0xf]
  %v893 = vld [vmem:[%s1 + $0x78] sm:$0xf]
  %v894 = vld [vmem:[%s1 + $0x7c] sm:$0xf]
  %v895 = vld [vmem:[%s2 + $0x24] sm:$0x1]
  %v896 = vlaneseq
  %v897 = vshrl.u32 %v896, 7
  %v898 = vsub.s32 0, %v897
  %v899 = vrot.slane %v895, %v898
  %v904 = vunpack.c.l.b16 %v891
  %v905 = vunpack.c.l.b16 %v892
  %v906 = vunpack.c.l.b16 %v893
  %v907 = vunpack.c.l.b16 %v894
  %v908 = vpack.c.b16 %v905, %v904
  %v909 = vpack.c.b16 %v907, %v906
  %v913 = vsel %vm173, %v890, 0
  %915 = vmatprep.subr.bf16.mxu0 0
  %916 = vmatpush1.bf16.msra.mxu0 %v908
  %917 = vmatprep.subr.bf16.mxu0 0
  %918 = vmatpush1.bf16.msra.mxu0 %v909
  %919 = vmatprep.subr.bf16.mxu0 0
  %920 = vmatpush1.bf16.msra.mxu0 0
  %921 = vmatprep.subr.bf16.mxu0 0
  %922 = vmatpush1.bf16.msra.mxu0 0
  %923 = vmatprep.subr.bf16.mxu0 0
  %924 = vmatpush1.bf16.msra.mxu0 0
  %925 = vmatprep.subr.bf16.mxu0 0
  %926 = vmatpush1.bf16.msra.mxu0 0
  %927 = vmatprep.subr.bf16.mxu0 0
  %928 = vmatpush1.bf16.msra.mxu0 0
  %929 = vmatprep.subr.bf16.mxu0 0
  %930 = vmatpush1.bf16.msra.mxu0 0
  %931 = vmatprep.subr.bf16.mxu0 0
  %932 = vmatpush1.bf16.msra.mxu0 0
  %933 = vmatprep.subr.bf16.mxu0 0
  %934 = vmatpush1.bf16.msra.mxu0 0
  %935 = vmatprep.subr.bf16.mxu0 0
  %936 = vmatpush1.bf16.msra.mxu0 0
  %937 = vmatprep.subr.bf16.mxu0 0
  %938 = vmatpush1.bf16.msra.mxu0 0
  %939 = vmatprep.subr.bf16.mxu0 0
  %940 = vmatpush1.bf16.msra.mxu0 0
  %941 = vmatprep.subr.bf16.mxu0 0
  %942 = vmatpush1.bf16.msra.mxu0 0
  %943 = vmatprep.subr.bf16.mxu0 0
  %944 = vmatpush1.bf16.msra.mxu0 0
  %945 = vmatprep.subr.bf16.mxu0 0
  %946 = vmatpush1.bf16.msra.mxu0 0
  %947 = vmatprep.mubr.bf16.mxu0 0
  %948 = vmatmul.mubr.bf16.gmra.mrb[0].mxu0 %v913
  %v949 = vpop.f32.mrb[0].mxu0
  %v950 = vadd.f32 %v899, %v949
  %v951 = vpop.f32.mrb[0].mxu0
  %v952 = vpop.f32.mrb[0].mxu0
  %v953 = vadd.f32 %v899, %v952
  %v954 = vpop.f32.mrb[0].mxu0
  %955 = vdwg.mxu0
  %v956 = vpack.c.bf16 %v953, %v950
  %v958 = vrot.slane %v956, 3
  %v959 = vrot.slane %v956, 6
  %v960 = vrot.slane %v956, 1
  %v964 = vsel %vm334, %v956, %v958
  %v967 = vsel %vm339, %v958, %v959
  %v969 = vsel %vm342, %v967, %v960
  %v971 = vmul.bf16 %v964, %v360
  %v972 = vmul.bf16 %v969, %v362
  %v973 = vmul.bf16 %v960, %v364
  %v974 = vmul.bf16 %v964, %v372
  %v975 = vmul.bf16 %v969, %v374
  %v976 = vmul.bf16 %v960, %v376
  %980 = vrot.lane.b32.xlu0 %v971, 96
  %v981 = vpop.permute.xlu0 %980
  %982 = vrot.lane.b32.xlu0 %v972, 96
  %v983 = vpop.permute.xlu0 %982
  %984 = vrot.lane.b32.xlu0 %v973, 96
  %v985 = vpop.permute.xlu0 %984
  %v986 = vsel %vm173, %v956, 0
  %v989 = vsel %vm173, %v981, 0
  %v992 = vsel %vm173, %v983, 0
  %v995 = vsel %vm173, %v985, 0
  %997 = vmatprep.subr.bf16.mxu0 0
  %998 = vmatpush1.bf16.xpose.msra.mxu0 %v989
  %999 = vmatprep.subr.bf16.mxu0 0
  %1000 = vmatpush1.bf16.xpose.msra.mxu0 %v992
  %1001 = vmatprep.subr.bf16.mxu0 0
  %1002 = vmatpush1.bf16.xpose.msra.mxu0 %v995
  %1003 = vmatprep.subr.bf16.mxu0 0
  %1004 = vmatpush1.bf16.xpose.msra.mxu0 0
  %1005 = vmatprep.subr.bf16.mxu0 0
  %1006 = vmatpush1.bf16.xpose.msra.mxu0 0
  %1007 = vmatprep.subr.bf16.mxu0 0
  %1008 = vmatpush1.bf16.xpose.msra.mxu0 0
  %1009 = vmatprep.subr.bf16.mxu0 0
  %1010 = vmatpush1.bf16.xpose.msra.mxu0 0
  %1011 = vmatprep.subr.bf16.mxu0 0
  %1012 = vmatpush1.bf16.xpose.msra.mxu0 0
  %1013 = vmatprep.subr.bf16.mxu0 0
  %1014 = vmatpush1.bf16.xpose.msra.mxu0 0
  %1015 = vmatprep.subr.bf16.mxu0 0
  %1016 = vmatpush1.bf16.xpose.msra.mxu0 0
  %1017 = vmatprep.subr.bf16.mxu0 0
  %1018 = vmatpush1.bf16.xpose.msra.mxu0 0
  %1019 = vmatprep.subr.bf16.mxu0 0
  %1020 = vmatpush1.bf16.xpose.msra.mxu0 0
  %1021 = vmatprep.subr.bf16.mxu0 0
  %1022 = vmatpush1.bf16.xpose.msra.mxu0 0
  %1023 = vmatprep.subr.bf16.mxu0 0
  %1024 = vmatpush1.bf16.xpose.msra.mxu0 0
  %1025 = vmatprep.subr.bf16.mxu0 0
  %1026 = vmatpush1.bf16.xpose.msra.mxu0 0
  %1027 = vmatprep.subr.bf16.mxu0 0
  %1028 = vmatpush1.bf16.xpose.msra.mxu0 0
  %1029 = vmatprep.mubr.bf16.mxu0 0
  %1030 = vmatmul.mubr.bf16.gmra.mrb[0].mxu0 %v986
  %v1031 = vpop.f32.mrb[0].mxu0
  %v1032 = vadd.f32 %v20, %v1031
  %v1033 = vpop.f32.mrb[0].mxu0
  %v1034 = vpop.f32.mrb[0].mxu0
  %v1035 = vadd.f32 %v21, %v1034
  %v1036 = vpop.f32.mrb[0].mxu0
  %1037 = vdwg.mxu0
  %v1038 = vsel %vm444, %v1032, -inf
  %1039 = vmax.xlane.f32.xlu0 %v1038
  %v1040 = vpop.xlane.xlu0 %1039
  %v1041 = vsel %vm448, %v1035, -inf
  %1042 = vmax.xlane.f32.xlu0 %v1041
  %v1043 = vpop.xlane.xlu0 %1042
  %v1044 = vsub.f32 %v1032, %v1040
  %v1045 = vsub.f32 %v1035, %v1043
  %v1046 = vmul.f32 %v1044, 1.442695
  %v1047 = vpow.pop %v1046
  %v1048 = vmul.f32 %v1045, 1.442695
  %v1049 = vpow.pop %v1048
  %v1050 = vpack.c.bf16 %v1049, %v1047
  %v1052 = vsel %vm444, %v1050, 0
  %1054 = vmatprep.subr.bf16.mxu0 0
  %1055 = vmatpush1.bf16.msra.mxu0 %v356
  %1056 = vmatprep.subr.bf16.mxu0 0
  %1057 = vmatpush1.bf16.msra.mxu0 %v357
  %1058 = vmatprep.subr.bf16.mxu0 0
  %1059 = vmatpush1.bf16.msra.mxu0 %v466
  %1060 = vmatprep.subr.bf16.mxu0 0
  %1061 = vmatpush1.bf16.msra.mxu0 0
  %1062 = vmatprep.subr.bf16.mxu0 0
  %1063 = vmatpush1.bf16.msra.mxu0 0
  %1064 = vmatprep.subr.bf16.mxu0 0
  %1065 = vmatpush1.bf16.msra.mxu0 0
  %1066 = vmatprep.subr.bf16.mxu0 0
  %1067 = vmatpush1.bf16.msra.mxu0 0
  %1068 = vmatprep.subr.bf16.mxu0 0
  %1069 = vmatpush1.bf16.msra.mxu0 0
  %1070 = vmatprep.subr.bf16.mxu0 0
  %1071 = vmatpush1.bf16.msra.mxu0 0
  %1072 = vmatprep.subr.bf16.mxu0 0
  %1073 = vmatpush1.bf16.msra.mxu0 0
  %1074 = vmatprep.subr.bf16.mxu0 0
  %1075 = vmatpush1.bf16.msra.mxu0 0
  %1076 = vmatprep.subr.bf16.mxu0 0
  %1077 = vmatpush1.bf16.msra.mxu0 0
  %1078 = vmatprep.subr.bf16.mxu0 0
  %1079 = vmatpush1.bf16.msra.mxu0 0
  %1080 = vmatprep.subr.bf16.mxu0 0
  %1081 = vmatpush1.bf16.msra.mxu0 0
  %1082 = vmatprep.subr.bf16.mxu0 0
  %1083 = vmatpush1.bf16.msra.mxu0 0
  %1084 = vmatprep.subr.bf16.mxu0 0
  %1085 = vmatpush1.bf16.msra.mxu0 0
  %1086 = vmatprep.mubr.bf16.mxu0 0
  %1087 = vmatmul.mubr.bf16.gmra.mrb[0].mxu0 %v1052
  %v1088 = vpop.f32.mrb[0].mxu0
  %v1089 = vadd.f32 0.0, %v1088
  %v1090 = vpop.f32.mrb[0].mxu0
  %v1091 = vpop.f32.mrb[0].mxu0
  %v1092 = vadd.f32 0.0, %v1091
  %v1093 = vpop.f32.mrb[0].mxu0
  %1094 = vdwg.mxu0
  %1098 = vrot.lane.b32.xlu0 %v974, 64
  %v1099 = vpop.permute.xlu0 %1098
  %1100 = vrot.lane.b32.xlu0 %v975, 64
  %v1101 = vpop.permute.xlu0 %1100
  %1102 = vrot.lane.b32.xlu0 %v976, 64
  %v1103 = vpop.permute.xlu0 %1102
  %v1107 = vsel %vm464, %v1103, 0
  %1109 = vmatprep.subr.bf16.mxu0 0
  %1110 = vmatpush1.bf16.msra.mxu0 %v1099
  %1111 = vmatprep.subr.bf16.mxu0 0
  %1112 = vmatpush1.bf16.msra.mxu0 %v1101
  %1113 = vmatprep.subr.bf16.mxu0 0
  %1114 = vmatpush1.bf16.msra.mxu0 %v1107
  %1115 = vmatprep.subr.bf16.mxu0 0
  %1116 = vmatpush1.bf16.msra.mxu0 0
  %1117 = vmatprep.subr.bf16.mxu0 0
  %1118 = vmatpush1.bf16.msra.mxu0 0
  %1119 = vmatprep.subr.bf16.mxu0 0
  %1120 = vmatpush1.bf16.msra.mxu0 0
  %1121 = vmatprep.subr.bf16.mxu0 0
  %1122 = vmatpush1.bf16.msra.mxu0 0
  %1123 = vmatprep.subr.bf16.mxu0 0
  %1124 = vmatpush1.bf16.msra.mxu0 0
  %1125 = vmatprep.subr.bf16.mxu0 0
  %1126 = vmatpush1.bf16.msra.mxu0 0
  %1127 = vmatprep.subr.bf16.mxu0 0
  %1128 = vmatpush1.bf16.msra.mxu0 0
  %1129 = vmatprep.subr.bf16.mxu0 0
  %1130 = vmatpush1.bf16.msra.mxu0 0
  %1131 = vmatprep.subr.bf16.mxu0 0
  %1132 = vmatpush1.bf16.msra.mxu0 0
  %1133 = vmatprep.subr.bf16.mxu0 0
  %1134 = vmatpush1.bf16.msra.mxu0 0
  %1135 = vmatprep.subr.bf16.mxu0 0
  %1136 = vmatpush1.bf16.msra.mxu0 0
  %1137 = vmatprep.subr.bf16.mxu0 0
  %1138 = vmatpush1.bf16.msra.mxu0 0
  %1139 = vmatprep.subr.bf16.mxu0 0
  %1140 = vmatpush1.bf16.msra.mxu0 0
  %1141 = vmatprep.mubr.bf16.mxu0 0
  %1142 = vmatmul.mubr.bf16.gmra.mrb[0].mxu0 %v1052
  %v1143 = vpop.f32.mrb[0].mxu0
  %v1144 = vadd.f32 0.0, %v1143
  %v1145 = vpop.f32.mrb[0].mxu0
  %v1146 = vpop.f32.mrb[0].mxu0
  %v1147 = vadd.f32 0.0, %v1146
  %v1148 = vpop.f32.mrb[0].mxu0
  %1149 = vdwg.mxu0
  %v1150 = vrcp.pop %v1089
  %v1151 = vrcp.pop %v1092
  %v1152 = vmul.f32 %v1144, %v1150
  %v1153 = vmul.f32 %v1147, %v1151
  %v1154 = vpack.c.bf16 %v1153, %v1152
  %v1155 = vld [vmem:[%s1 + $0x90] sm:$0xf]
  %v1156 = vld [vmem:[%s1 + $0x94] sm:$0xf]
  %v1157 = vld [vmem:[%s1 + $0x98] sm:$0xf]
  %v1158 = vld [vmem:[%s1 + $0x9c] sm:$0xf]
  %v1159 = vld [vmem:[%s2 + $0x25] sm:$0x1]
  %v1160 = vlaneseq
  %v1161 = vshrl.u32 %v1160, 7
  %v1162 = vsub.s32 0, %v1161
  %v1163 = vrot.slane %v1159, %v1162
  %v1168 = vunpack.c.l.b16 %v1155
  %v1169 = vunpack.c.l.b16 %v1156
  %v1170 = vunpack.c.l.b16 %v1157
  %v1171 = vunpack.c.l.b16 %v1158
  %v1172 = vpack.c.b16 %v1169, %v1168
  %v1173 = vpack.c.b16 %v1171, %v1170
  %v1177 = vsel %vm173, %v1154, 0
  %1179 = vmatprep.subr.bf16.mxu0 0
  %1180 = vmatpush1.bf16.msra.mxu0 %v1172
  %1181 = vmatprep.subr.bf16.mxu0 0
  %1182 = vmatpush1.bf16.msra.mxu0 %v1173
  %1183 = vmatprep.subr.bf16.mxu0 0
  %1184 = vmatpush1.bf16.msra.mxu0 0
  %1185 = vmatprep.subr.bf16.mxu0 0
  %1186 = vmatpush1.bf16.msra.mxu0 0
  %1187 = vmatprep.subr.bf16.mxu0 0
  %1188 = vmatpush1.bf16.msra.mxu0 0
  %1189 = vmatprep.subr.bf16.mxu0 0
  %1190 = vmatpush1.bf16.msra.mxu0 0
  %1191 = vmatprep.subr.bf16.mxu0 0
  %1192 = vmatpush1.bf16.msra.mxu0 0
  %1193 = vmatprep.subr.bf16.mxu0 0
  %1194 = vmatpush1.bf16.msra.mxu0 0
  %1195 = vmatprep.subr.bf16.mxu0 0
  %1196 = vmatpush1.bf16.msra.mxu0 0
  %1197 = vmatprep.subr.bf16.mxu0 0
  %1198 = vmatpush1.bf16.msra.mxu0 0
  %1199 = vmatprep.subr.bf16.mxu0 0
  %1200 = vmatpush1.bf16.msra.mxu0 0
  %1201 = vmatprep.subr.bf16.mxu0 0
  %1202 = vmatpush1.bf16.msra.mxu0 0
  %1203 = vmatprep.subr.bf16.mxu0 0
  %1204 = vmatpush1.bf16.msra.mxu0 0
  %1205 = vmatprep.subr.bf16.mxu0 0
  %1206 = vmatpush1.bf16.msra.mxu0 0
  %1207 = vmatprep.subr.bf16.mxu0 0
  %1208 = vmatpush1.bf16.msra.mxu0 0
  %1209 = vmatprep.subr.bf16.mxu0 0
  %1210 = vmatpush1.bf16.msra.mxu0 0
  %1211 = vmatprep.mubr.bf16.mxu0 0
  %1212 = vmatmul.mubr.bf16.gmra.mrb[0].mxu0 %v1177
  %v1213 = vpop.f32.mrb[0].mxu0
  %v1214 = vadd.f32 %v1163, %v1213
  %v1215 = vpop.f32.mrb[0].mxu0
  %v1216 = vpop.f32.mrb[0].mxu0
  %v1217 = vadd.f32 %v1163, %v1216
  %v1218 = vpop.f32.mrb[0].mxu0
  %1219 = vdwg.mxu0
  %v1220 = vadd.f32 %v844, %v1214
  %v1221 = vadd.f32 %v845, %v1217
  %v1222 = vld [vmem:[%s2 + $0x22] sm:$0x1]
  %v1223 = vld [vmem:[%s2 + $0x23] sm:$0x1]
  %v1224 = vsel %vm173, %v1220, 0.0
  %1225 = vadd.xlane.f32.xlu0 %v1224
  %v1226 = vpop.xlane.xlu0 %1225
  %v1227 = vsel %vm177, %v1221, 0.0
  %1228 = vadd.xlane.f32.xlu0 %v1227
  %v1229 = vpop.xlane.xlu0 %1228
  %v1230 = vmul.f32 %v1226, %v181
  %v1231 = vmul.f32 %v1229, %v181
  %v1232 = vmul.f32 %v1220, %v1220
  %v1233 = vmul.f32 %v1221, %v1221
  %v1234 = vsel %vm173, %v1232, 0.0
  %1235 = vadd.xlane.f32.xlu0 %v1234
  %v1236 = vpop.xlane.xlu0 %1235
  %v1237 = vsel %vm177, %v1233, 0.0
  %1238 = vadd.xlane.f32.xlu0 %v1237
  %v1239 = vpop.xlane.xlu0 %1238
  %v1240 = vmul.f32 %v1236, %v181
  %v1241 = vmul.f32 %v1239, %v181
  %v1242 = vsub.f32 %v1220, %v1230
  %v1243 = vsub.f32 %v1221, %v1231
  %v1244 = vmul.f32 %v1230, %v1230
  %v1245 = vmul.f32 %v1231, %v1231
  %v1246 = vsub.f32 %v1240, %v1244
  %v1247 = vsub.f32 %v1241, %v1245
  %v1248 = vadd.f32 %v1246, 1e-05
  %v1249 = vadd.f32 %v1247, 1e-05
  %v1250 = vrsqrt.pop %v1248
  %v1251 = vrsqrt.pop %v1249
  %v1252 = vmul.f32 %v1242, %v1250
  %v1253 = vmul.f32 %v1243, %v1251
  %v1254 = vlaneseq
  %v1255 = vshrl.u32 %v1254, 7
  %v1256 = vsub.s32 0, %v1255
  %v1257 = vrot.slane %v1222, %v1256
  %v1258 = vmul.f32 %v1252, %v1257
  %v1259 = vmul.f32 %v1253, %v1257
  %v1260 = vlaneseq
  %v1261 = vshrl.u32 %v1260, 7
  %v1262 = vsub.s32 0, %v1261
  %v1263 = vrot.slane %v1223, %v1262
  %v1264 = vadd.f32 %v1258, %v1263
  %v1265 = vadd.f32 %v1259, %v1263
  %v1266 = vpack.c.bf16 %v1265, %v1264
  %v1267 = vld [vmem:[%s1 + $0xb0] sm:$0xf]
  %v1268 = vld [vmem:[%s1 + $0xb4] sm:$0xf]
  %v1269 = vld [vmem:[%s1 + $0xb8] sm:$0xf]
  %v1270 = vld [vmem:[%s1 + $0xbc] sm:$0xf]
  %v1271 = vld [vmem:[%s2 + $0x26] sm:$0x1]
  %v1272 = vlaneseq
  %v1273 = vshrl.u32 %v1272, 7
  %v1274 = vsub.s32 0, %v1273
  %v1275 = vrot.slane %v1271, %v1274
  %v1280 = vunpack.c.l.b16 %v1267
  %v1281 = vunpack.c.l.b16 %v1268
  %v1282 = vunpack.c.l.b16 %v1269
  %v1283 = vunpack.c.l.b16 %v1270
  %v1284 = vpack.c.b16 %v1281, %v1280
  %v1285 = vpack.c.b16 %v1283, %v1282
  %v1289 = vsel %vm173, %v1266, 0
  %1291 = vmatprep.subr.bf16.mxu0 0
  %1292 = vmatpush1.bf16.msra.mxu0 %v1284
  %1293 = vmatprep.subr.bf16.mxu0 0
  %1294 = vmatpush1.bf16.msra.mxu0 %v1285
  %1295 = vmatprep.subr.bf16.mxu0 0
  %1296 = vmatpush1.bf16.msra.mxu0 0
  %1297 = vmatprep.subr.bf16.mxu0 0
  %1298 = vmatpush1.bf16.msra.mxu0 0
  %1299 = vmatprep.subr.bf16.mxu0 0
  %1300 = vmatpush1.bf16.msra.mxu0 0
  %1301 = vmatprep.subr.bf16.mxu0 0
  %1302 = vmatpush1.bf16.msra.mxu0 0
  %1303 = vmatprep.subr.bf16.mxu0 0
  %1304 = vmatpush1.bf16.msra.mxu0 0
  %1305 = vmatprep.subr.bf16.mxu0 0
  %1306 = vmatpush1.bf16.msra.mxu0 0
  %1307 = vmatprep.subr.bf16.mxu0 0
  %1308 = vmatpush1.bf16.msra.mxu0 0
  %1309 = vmatprep.subr.bf16.mxu0 0
  %1310 = vmatpush1.bf16.msra.mxu0 0
  %1311 = vmatprep.subr.bf16.mxu0 0
  %1312 = vmatpush1.bf16.msra.mxu0 0
  %1313 = vmatprep.subr.bf16.mxu0 0
  %1314 = vmatpush1.bf16.msra.mxu0 0
  %1315 = vmatprep.subr.bf16.mxu0 0
  %1316 = vmatpush1.bf16.msra.mxu0 0
  %1317 = vmatprep.subr.bf16.mxu0 0
  %1318 = vmatpush1.bf16.msra.mxu0 0
  %1319 = vmatprep.subr.bf16.mxu0 0
  %1320 = vmatpush1.bf16.msra.mxu0 0
  %1321 = vmatprep.subr.bf16.mxu0 0
  %1322 = vmatpush1.bf16.msra.mxu0 0
  %1323 = vmatprep.mubr.bf16.mxu0 0
  %1324 = vmatmul.mubr.bf16.gmra.mrb[0].mxu0 %v1289
  %v1325 = vpop.f32.mrb[0].mxu0
  %v1326 = vadd.f32 %v1275, %v1325
  %v1327 = vpop.f32.mrb[0].mxu0
  %v1328 = vpop.f32.mrb[0].mxu0
  %v1329 = vadd.f32 %v1275, %v1328
  %v1330 = vpop.f32.mrb[0].mxu0
  %1331 = vdwg.mxu0
  %v1332 = vmul.f32 %v1326, 1.702
  %v1333 = vmul.f32 %v1329, 1.702
  %v1334 = vxor.u32 %v1332, 2147483648
  %v1335 = vxor.u32 %v1333, 2147483648
  %v1336 = vmul.f32 %v1334, 1.442695
  %v1337 = vpow.pop %v1336
  %v1338 = vmul.f32 %v1335, 1.442695
  %v1339 = vpow.pop %v1338
  %v1340 = vadd.f32 %v1337, 1.0
  %v1341 = vadd.f32 %v1339, 1.0
  %v1342 = vrcp.pop %v1340
  %v1343 = vmul.f32 1.0, %v1342
  %v1344 = vrcp.pop %v1341
  %v1345 = vmul.f32 1.0, %v1344
  %v1346 = vmul.f32 %v1326, %v1343
  %v1347 = vmul.f32 %v1329, %v1345
  %v1348 = vpack.c.bf16 %v1347, %v1346
  %v1349 = vld [vmem:[%s1 + $0xe0] sm:$0xf]
  %v1350 = vld [vmem:[%s1 + $0xe4] sm:$0xf]
  %v1351 = vld [vmem:[%s1 + $0xe8] sm:$0xf]
  %v1352 = vld [vmem:[%s1 + $0xec] sm:$0xf]
  %v1353 = vld [vmem:[%s1 + $0xf0] sm:$0xf]
  %v1354 = vld [vmem:[%s1 + $0xf4] sm:$0xf]
  %v1355 = vld [vmem:[%s1 + $0xf8] sm:$0xf]
  %v1356 = vld [vmem:[%s1 + $0xfc] sm:$0xf]
  %v1357 = vld [vmem:[%s2 + $0x27] sm:$0x1]
  %v1358 = vlaneseq
  %v1359 = vshrl.u32 %v1358, 7
  %v1360 = vsub.s32 0, %v1359
  %v1361 = vrot.slane %v1357, %v1360
  %v1370 = vunpack.c.l.b16 %v1349
  %v1371 = vunpack.c.l.b16 %v1350
  %v1372 = vunpack.c.l.b16 %v1351
  %v1373 = vunpack.c.l.b16 %v1352
  %v1374 = vunpack.c.l.b16 %v1353
  %v1375 = vunpack.c.l.b16 %v1354
  %v1376 = vunpack.c.l.b16 %v1355
  %v1377 = vunpack.c.l.b16 %v1356
  %v1378 = vpack.c.b16 %v1371, %v1370
  %v1379 = vpack.c.b16 %v1373, %v1372
  %v1380 = vpack.c.b16 %v1375, %v1374
  %v1381 = vpack.c.b16 %v1377, %v1376
  %v1387 = vsel %vm126, %v1348, 0
  %1389 = vmatprep.subr.bf16.mxu0 0
  %1390 = vmatpush1.bf16.msra.mxu0 %v1378
  %1391 = vmatprep.subr.bf16.mxu0 0
  %1392 = vmatpush1.bf16.msra.mxu0 %v1379
  %1393 = vmatprep.subr.bf16.mxu0 0
  %1394 = vmatpush1.bf16.msra.mxu0 %v1380
  %1395 = vmatprep.subr.bf16.mxu0 0
  %1396 = vmatpush1.bf16.msra.mxu0 %v1381
  %1397 = vmatprep.subr.bf16.mxu0 0
  %1398 = vmatpush1.bf16.msra.mxu0 0
  %1399 = vmatprep.subr.bf16.mxu0 0
  %1400 = vmatpush1.bf16.msra.mxu0 0
  %1401 = vmatprep.subr.bf16.mxu0 0
  %1402 = vmatpush1.bf16.msra.mxu0 0
  %1403 = vmatprep.subr.bf16.mxu0 0
  %1404 = vmatpush1.bf16.msra.mxu0 0
  %1405 = vmatprep.subr.bf16.mxu0 0
  %1406 = vmatpush1.bf16.msra.mxu0 0
  %1407 = vmatprep.subr.bf16.mxu0 0
  %1408 = vmatpush1.bf16.msra.mxu0 0
  %1409 = vmatprep.subr.bf16.mxu0 0
  %1410 = vmatpush1.bf16.msra.mxu0 0
  %1411 = vmatprep.subr.bf16.mxu0 0
  %1412 = vmatpush1.bf16.msra.mxu0 0
  %1413 = vmatprep.subr.bf16.mxu0 0
  %1414 = vmatpush1.bf16.msra.mxu0 0
  %1415 = vmatprep.subr.bf16.mxu0 0
  %1416 = vmatpush1.bf16.msra.mxu0 0
  %1417 = vmatprep.subr.bf16.mxu0 0
  %1418 = vmatpush1.bf16.msra.mxu0 0
  %1419 = vmatprep.subr.bf16.mxu0 0
  %1420 = vmatpush1.bf16.msra.mxu0 0
  %1421 = vmatprep.mubr.bf16.mxu0 0
  %1422 = vmatmul.mubr.bf16.gmra.mrb[0].mxu0 %v1387
  %v1423 = vpop.f32.mrb[0].mxu0
  %v1424 = vadd.f32 %v1361, %v1423
  %v1425 = vpop.f32.mrb[0].mxu0
  %v1426 = vpop.f32.mrb[0].mxu0
  %v1427 = vadd.f32 %v1361, %v1426
  %v1428 = vpop.f32.mrb[0].mxu0
  %1429 = vdwg.mxu0
  %v1430 = vadd.f32 %v1220, %v1424
  %v1431 = vadd.f32 %v1221, %v1427
  %v1433 = vrot.slane %v1430, 4
  %vm1435 = vcmask 1040384
  %v1436 = vsel %vm1435, %v1430, %v1433
  %v1437 = vld [vmem:[%s2 + $0x12] sm:$0x1]
  %v1438 = vld [vmem:[%s2 + $0x13] sm:$0x1]
  %v1439 = vsel %vm177, %v1436, 0.0
  %1440 = vadd.xlane.f32.xlu0 %v1439
  %v1441 = vpop.xlane.xlu0 %1440
  %v1442 = vmul.f32 %v1441, %v181
  %v1443 = vmul.f32 %v1436, %v1436
  %v1444 = vsel %vm177, %v1443, 0.0
  %1445 = vadd.xlane.f32.xlu0 %v1444
  %v1446 = vpop.xlane.xlu0 %1445
  %v1447 = vmul.f32 %v1446, %v181
  %v1448 = vsub.f32 %v1436, %v1442
  %v1449 = vmul.f32 %v1442, %v1442
  %v1450 = vsub.f32 %v1447, %v1449
  %v1451 = vadd.f32 %v1450, 1e-05
  %v1452 = vrsqrt.pop %v1451
  %v1453 = vmul.f32 %v1448, %v1452
  %v1454 = vlaneseq
  %v1455 = vshrl.u32 %v1454, 7
  %v1456 = vsub.s32 0, %v1455
  %v1457 = vrot.slane %v1437, %v1456
  %v1458 = vmul.f32 %v1453, %v1457
  %v1459 = vlaneseq
  %v1460 = vshrl.u32 %v1459, 7
  %v1461 = vsub.s32 0, %v1460
  %v1462 = vrot.slane %v1438, %v1461
  %v1463 = vadd.f32 %v1458, %v1462
  %v1464 = vpack.c.bf16 %v1463, %v1463
  %v1465 = vld [vmem:[%s1 + $0x100] sm:$0xf]
  %v1466 = vld [vmem:[%s1 + $0x104] sm:$0xf]
  %v1467 = vld [vmem:[%s1 + $0x108] sm:$0xf]
  %v1468 = vld [vmem:[%s1 + $0x10c] sm:$0xf]
  %v1473 = vunpack.c.l.b16 %v1465
  %v1474 = vunpack.c.l.b16 %v1466
  %v1475 = vunpack.c.l.b16 %v1467
  %v1476 = vunpack.c.l.b16 %v1468
  %v1477 = vpack.c.b16 %v1474, %v1473
  %v1478 = vpack.c.b16 %v1476, %v1475
  %v1482 = vsel %vm173, %v1464, 0
  %1484 = vmatprep.subr.bf16.mxu0 0
  %1485 = vmatpush1.bf16.msra.mxu0 %v1477
  %1486 = vmatprep.subr.bf16.mxu0 0
  %1487 = vmatpush1.bf16.msra.mxu0 %v1478
  %1488 = vmatprep.subr.bf16.mxu0 0
  %1489 = vmatpush1.bf16.msra.mxu0 0
  %1490 = vmatprep.subr.bf16.mxu0 0
  %1491 = vmatpush1.bf16.msra.mxu0 0
  %1492 = vmatprep.subr.bf16.mxu0 0
  %1493 = vmatpush1.bf16.msra.mxu0 0
  %1494 = vmatprep.subr.bf16.mxu0 0
  %1495 = vmatpush1.bf16.msra.mxu0 0
  %1496 = vmatprep.subr.bf16.mxu0 0
  %1497 = vmatpush1.bf16.msra.mxu0 0
  %1498 = vmatprep.subr.bf16.mxu0 0
  %1499 = vmatpush1.bf16.msra.mxu0 0
  %1500 = vmatprep.subr.bf16.mxu0 0
  %1501 = vmatpush1.bf16.msra.mxu0 0
  %1502 = vmatprep.subr.bf16.mxu0 0
  %1503 = vmatpush1.bf16.msra.mxu0 0
  %1504 = vmatprep.subr.bf16.mxu0 0
  %1505 = vmatpush1.bf16.msra.mxu0 0
  %1506 = vmatprep.subr.bf16.mxu0 0
  %1507 = vmatpush1.bf16.msra.mxu0 0
  %1508 = vmatprep.subr.bf16.mxu0 0
  %1509 = vmatpush1.bf16.msra.mxu0 0
  %1510 = vmatprep.subr.bf16.mxu0 0
  %1511 = vmatpush1.bf16.msra.mxu0 0
  %1512 = vmatprep.subr.bf16.mxu0 0
  %1513 = vmatpush1.bf16.msra.mxu0 0
  %1514 = vmatprep.subr.bf16.mxu0 0
  %1515 = vmatpush1.bf16.msra.mxu0 0
  %1516 = vmatprep.mubr.bf16.mxu0 0
  %1517 = vmatmul.mubr.bf16.gmra.mrb[0].mxu0 %v1482
  %v1518 = vpop.f32.mrb[0].mxu0
  %v1519 = vadd.f32 0.0, %v1518
  %v1520 = vpop.f32.mrb[0].mxu0
  %v1521 = vpop.f32.mrb[0].mxu0
  %v1522 = vpop.f32.mrb[0].mxu0
  %1523 = vdwg.mxu0
  %v1524 = vsel %vm173, %v1430, 0.0
  %v1525 = vsel %vm173, %v1431, 0.0
  %vm1526 = vcmask 130048
  %v1527 = vsel %vm1526, %v1519, 0.0
  %v1529 = vrot.slane %v1527, 6
  %v1531 = vsel %vm339, %v1525, %v1529
  %v1532 = vsel %vm464, %v1531, 0.0
  %1533 = vst [vmem:[%s3] sm:$0xff] %v1524
  %1534 = vst [vmem:[%s3 + $0x8] sm:$0xff] %v1532
  // Predicated region
  $region14: #{clip_encoder_forward.1} parent=0 // pred_check
    _
  $region15: #{clip_encoder_forward.1} parent=0 // pred_check_branch
    %1536 = sbr.rel (0) target = $region17
  $region16: #{clip_encoder_forward.1} parent=0 // pred_region
    _
  $region17: #{clip_encoder_forward.1} parent=0 // pred_fallthru
    _
  // Predicated region
  $region18: #{clip_encoder_forward.1} parent=0 // pred_check
    _
  $region19: #{clip_encoder_forward.1} parent=0 // pred_check_branch
    %1538 = sbr.rel (0) target = $region21
  $region20: #{clip_encoder_forward.1} parent=0 // pred_region
    _
  $region21: #{clip_encoder_forward.1} parent=0 // pred_fallthru
    _

</llo_original>
